<compile_context>
chip_gen: v5e
topology: v5e:2x2
jax: 0.10.0
libtpu: 0.0.40
codegen_flags: <defaults>
</compile_context>

<pallas_src>
import jax
import jax.numpy as jnp
from jax.experimental import pallas as pl
from jax.experimental.pallas import tpu as pltpu


_HIGHEST = jax.lax.Precision.HIGHEST
# Per-step input block target: big enough to amortise the ~0.35us/step overhead
# and approach HBM roofline, small enough to double-buffer inside v7x's VMEM.
_TARGET_BLOCK_BYTES = 2 * 1024 * 1024
_VMEM_LIMIT_BYTES = 40 * 1024 * 1024


def _divisors(n):
    return [d for d in range(1, n + 1) if n % d == 0]


def _choose_planes_per_step(B, C, h, plane_bytes):
    """Number of (b, c) planes handled per grid step.

    Either a divisor of C (a slice of one image's channels) or C * k with
    k | B (k whole images), so both the input rows and the per-subband output
    rows are plain rectangular blocks of the (reshaped) arrays.
    """
    cands = set(_divisors(C))
    cands.update(C * k for k in _divisors(B) if k <= 8)  # cap static unroll
    def ok(g):  # (8, 128) block-shape rule on the second-minor dim
        return g == B * C or (g * h) % 8 == 0
    valid = sorted(g for g in cands if ok(g))
    if not valid:
        return B * C
    fits = [g for g in valid if g * plane_bytes <= _TARGET_BLOCK_BYTES]
    two_steps = [g for g in fits if (B * C) // g >= 2]  # keep both v7x cores busy
    if two_steps:
        return max(two_steps)
    if fits:
        return max(fits)
    return valid[0]


def _make_dwt_kernel(k_sub, rows_per_sub, W, w, dot_precision):
    def kernel(x_ref, ps_ref, pd_ref, o_ref):
        ps = ps_ref[...]            # (W, w): 0.5 * (even col + odd col)
        pd = pd_ref[...]            # (W, w): 0.5 * (odd col - even col)
        for jb in range(k_sub):     # static unroll; k_sub is small
            r0 = jb * rows_per_sub
            r1 = r0 + rows_per_sub
            xe = x_ref[r0:r1, :W]   # even source rows
            xo = x_ref[r0:r1, W:]   # odd source rows
            s = xe + xo             # row-pair sums  (VPU)
            d = xo - xe             # row-pair diffs (VPU)
            ll = jnp.dot(s, ps, precision=dot_precision,
                         preferred_element_type=jnp.float32)
            hl = jnp.dot(s, pd, precision=dot_precision,
                         preferred_element_type=jnp.float32)
            lh = jnp.dot(d, ps, precision=dot_precision,
                         preferred_element_type=jnp.float32)
            hh = jnp.dot(d, pd, precision=dot_precision,
                         preferred_element_type=jnp.float32)
            o_ref[jb, 0] = ll.astype(o_ref.dtype)
            o_ref[jb, 1] = hl.astype(o_ref.dtype)
            o_ref[jb, 2] = lh.astype(o_ref.dtype)
            o_ref[jb, 3] = hh.astype(o_ref.dtype)
    return kernel


def _dwt_impl(x, dot_precision):
    B, C, H, W = x.shape
    if H % 2 or W % 2:
        raise ValueError("DWT requires even spatial dimensions")
    h, w = H // 2, W // 2
    dtype = x.dtype
    itemsize = jnp.dtype(dtype).itemsize

    # Free view: (B, C, H, W) -> (B*C*h, 2W); row r holds source rows (2r, 2r+1).
    xrows = x.reshape(B * C * h, 2 * W)

    # Constant column-Haar matrices (W de-interleave + butterfly + 1/2 scaling).
    r = jnp.arange(W)[:, None]
    c = jnp.arange(w)[None, :]
    pair = (r // 2) == c
    p_sum = jnp.where(pair, 0.5, 0.0).astype(dtype)
    p_diff = jnp.where(pair, jnp.where(r % 2 == 0, -0.5, 0.5), 0.0).astype(dtype)

    G = _choose_planes_per_step(B, C, h, H * W * itemsize)
    if G >= C:                      # G = k_sub whole images per step
        k_sub = G // C
        rows_per_sub = C * h
        out_index_map = lambda i: (i, 0, 0, 0)
    else:                           # G channels (G | C) of one image per step
        k_sub = 1
        rows_per_sub = G * h
        cpg = C // G
        out_index_map = lambda i: (i // cpg, 0, i % cpg, 0)
    nsteps = (B * C) // G

    kernel = _make_dwt_kernel(k_sub, rows_per_sub, W, w, dot_precision)

    out = pl.pallas_call(
        kernel,
        out_shape=jax.ShapeDtypeStruct((B, 4, C * h, w), dtype),
        grid=(nsteps,),
        in_specs=[
            pl.BlockSpec((G * h, 2 * W), lambda i: (i, 0)),   # contiguous planes
            pl.BlockSpec((W, w), lambda i: (0, 0)),           # p_sum (resident)
            pl.BlockSpec((W, w), lambda i: (0, 0)),           # p_diff (resident)
        ],
        out_specs=pl.BlockSpec((k_sub, 4, rows_per_sub, w), out_index_map),
        compiler_params=pltpu.CompilerParams(
            dimension_semantics=("parallel",),
            vmem_limit_bytes=_VMEM_LIMIT_BYTES,
        ),
    )(xrows, p_sum, p_diff)

    # (B, 4, C*h, w) -> (B, 4C, h, w): free regrouping, matches
    # torch.cat((LL, HL, LH, HH), dim=1).
    return out.reshape(B, 4 * C, h, w)


_dwt_jit = jax.jit(_dwt_impl, static_argnums=(1,))


def dwt(x):
    """Pallas TPU implementation of DWT.forward / dwt_init.  x: (B, C, H, W)."""
    try:
        return _dwt_jit(x, _HIGHEST)
    except Exception:
        # Fallback for jax versions whose Mosaic dot lowering only accepts the
        # default matmul precision.
        return _dwt_jit(x, None)


def dwt_reference(x):
    """Pure-JAX reference mirroring the PyTorch dwt_init exactly."""
    x01 = x[:, :, 0::2, :] / 2
    x02 = x[:, :, 1::2, :] / 2
    x1 = x01[:, :, :, 0::2]
    x2 = x02[:, :, :, 0::2]
    x3 = x01[:, :, :, 1::2]
    x4 = x02[:, :, :, 1::2]
    x_LL = x1 + x2 + x3 + x4
    x_HL = -x1 - x2 + x3 + x4
    x_LH = -x1 + x2 - x3 + x4
    x_HH = x1 - x2 - x3 + x4
    return jnp.concatenate((x_LL, x_HL, x_LH, x_HH), axis=1)


if __name__ == "__main__":
    # DWT has no learnable parameters (requires_grad=False only).
    key = jax.random.PRNGKey(0)
    x = jax.random.normal(key, (2, 4, 16, 16), dtype=jnp.float32)

    out = jax.block_until_ready(dwt(x))
    ref = jax.block_until_ready(dwt_reference(x))

    assert out.shape == (2, 16, 8, 8), out.shape
    err = float(jnp.max(jnp.abs(out - ref)))
    assert jnp.allclose(out, ref, atol=1e-5, rtol=1e-5), f"mismatch vs reference: {err}"
    print("KERNEL_OK")
</pallas_src>

<mosaic_0001>
module attributes {stable_mosaic.version = 11 : i64} {
  func.func @kernel(%arg0: i32, %arg1: memref<32x32xf32, #tpu.memory_space<vmem>>, %arg2: memref<16x8xf32, #tpu.memory_space<vmem>>, %arg3: memref<16x8xf32, #tpu.memory_space<vmem>>, %arg4: memref<1x4x32x8xf32, #tpu.memory_space<vmem>>) attributes {dimension_semantics = [#tpu.dimension_semantics<parallel>], iteration_bounds = array<i64: 2>, scalar_prefetch = 0 : i64, scratch_operands = 0 : i64, tpu.core_type = #tpu.core_type<tc>, window_params = [{transform_indices = @transform_0, window_bounds = array<i64: 32, 32>}, {pipeline_mode = #tpu.pipeline_mode<synchronous>, transform_indices = @transform_1, window_bounds = array<i64: 16, 8>}, {pipeline_mode = #tpu.pipeline_mode<synchronous>, transform_indices = @transform_2, window_bounds = array<i64: 16, 8>}, {transform_indices = @transform_3, window_bounds = array<i64: 1, 4, 32, 8>}]} {
    %c0 = arith.constant 0 : index
    %c0_0 = arith.constant 0 : index
    %0 = vector.load %arg2[%c0, %c0_0] : memref<16x8xf32, #tpu.memory_space<vmem>>, vector<16x8xf32>
    %c0_1 = arith.constant 0 : index
    %c0_2 = arith.constant 0 : index
    %1 = vector.load %arg3[%c0_1, %c0_2] : memref<16x8xf32, #tpu.memory_space<vmem>>, vector<16x8xf32>
    %c0_3 = arith.constant 0 : index
    %c0_4 = arith.constant 0 : index
    %2 = vector.load %arg1[%c0_3, %c0_4] : memref<32x32xf32, #tpu.memory_space<vmem>>, vector<32x16xf32>
    %c0_5 = arith.constant 0 : index
    %c16 = arith.constant 16 : index
    %3 = vector.load %arg1[%c0_5, %c16] : memref<32x32xf32, #tpu.memory_space<vmem>>, vector<32x16xf32>
    %4 = arith.addf %2, %3 : vector<32x16xf32>
    %5 = arith.subf %3, %2 : vector<32x16xf32>
    %cst = arith.constant dense<0.000000e+00> : vector<32x8xf32>
    %6 = tpu.matmul %4, %0, %cst {dimension_numbers = #tpu.dot_dimension_numbers<[1], [0], [0], [1], [0, 0, 1, 1], [], []>, precision = #tpu.contract_precision<fp32>} : vector<32x16xf32>, vector<16x8xf32>, vector<32x8xf32> -> vector<32x8xf32>
    %cst_6 = arith.constant dense<0.000000e+00> : vector<32x8xf32>
    %7 = tpu.matmul %4, %1, %cst_6 {dimension_numbers = #tpu.dot_dimension_numbers<[1], [0], [0], [1], [0, 0, 1, 1], [], []>, precision = #tpu.contract_precision<fp32>} : vector<32x16xf32>, vector<16x8xf32>, vector<32x8xf32> -> vector<32x8xf32>
    %cst_7 = arith.constant dense<0.000000e+00> : vector<32x8xf32>
    %8 = tpu.matmul %5, %0, %cst_7 {dimension_numbers = #tpu.dot_dimension_numbers<[1], [0], [0], [1], [0, 0, 1, 1], [], []>, precision = #tpu.contract_precision<fp32>} : vector<32x16xf32>, vector<16x8xf32>, vector<32x8xf32> -> vector<32x8xf32>
    %cst_8 = arith.constant dense<0.000000e+00> : vector<32x8xf32>
    %9 = tpu.matmul %5, %1, %cst_8 {dimension_numbers = #tpu.dot_dimension_numbers<[1], [0], [0], [1], [0, 0, 1, 1], [], []>, precision = #tpu.contract_precision<fp32>} : vector<32x16xf32>, vector<16x8xf32>, vector<32x8xf32> -> vector<32x8xf32>
    %c0_9 = arith.constant 0 : index
    %c0_10 = arith.constant 0 : index
    %c0_11 = arith.constant 0 : index
    %c0_12 = arith.constant 0 : index
    %10 = vector.load %arg4[%c0_9, %c0_10, %c0_11, %c0_12] : memref<1x4x32x8xf32, #tpu.memory_space<vmem>>, vector<1x1x32x8xf32>
    %11 = vector.shape_cast %10 : vector<1x1x32x8xf32> to vector<32x8xf32>
    %12 = vector.shape_cast %6 : vector<32x8xf32> to vector<1x1x32x8xf32>
    tpu.vector_store %arg4[%c0_9, %c0_10, %c0_11, %c0_12], %12 {strides = array<i32>} : memref<1x4x32x8xf32, #tpu.memory_space<vmem>>, vector<1x1x32x8xf32>,
    %c0_13 = arith.constant 0 : index
    %c1 = arith.constant 1 : index
    %c0_14 = arith.constant 0 : index
    %c0_15 = arith.constant 0 : index
    %13 = vector.load %arg4[%c0_13, %c1, %c0_14, %c0_15] : memref<1x4x32x8xf32, #tpu.memory_space<vmem>>, vector<1x1x32x8xf32>
    %14 = vector.shape_cast %13 : vector<1x1x32x8xf32> to vector<32x8xf32>
    %15 = vector.shape_cast %7 : vector<32x8xf32> to vector<1x1x32x8xf32>
    tpu.vector_store %arg4[%c0_13, %c1, %c0_14, %c0_15], %15 {strides = array<i32>} : memref<1x4x32x8xf32, #tpu.memory_space<vmem>>, vector<1x1x32x8xf32>,
    %c0_16 = arith.constant 0 : index
    %c2 = arith.constant 2 : index
    %c0_17 = arith.constant 0 : index
    %c0_18 = arith.constant 0 : index
    %16 = vector.load %arg4[%c0_16, %c2, %c0_17, %c0_18] : memref<1x4x32x8xf32, #tpu.memory_space<vmem>>, vector<1x1x32x8xf32>
    %17 = vector.shape_cast %16 : vector<1x1x32x8xf32> to vector<32x8xf32>
    %18 = vector.shape_cast %8 : vector<32x8xf32> to vector<1x1x32x8xf32>
    tpu.vector_store %arg4[%c0_16, %c2, %c0_17, %c0_18], %18 {strides = array<i32>} : memref<1x4x32x8xf32, #tpu.memory_space<vmem>>, vector<1x1x32x8xf32>,
    %c0_19 = arith.constant 0 : index
    %c3 = arith.constant 3 : index
    %c0_20 = arith.constant 0 : index
    %c0_21 = arith.constant 0 : index
    %19 = vector.load %arg4[%c0_19, %c3, %c0_20, %c0_21] : memref<1x4x32x8xf32, #tpu.memory_space<vmem>>, vector<1x1x32x8xf32>
    %20 = vector.shape_cast %19 : vector<1x1x32x8xf32> to vector<32x8xf32>
    %21 = vector.shape_cast %9 : vector<32x8xf32> to vector<1x1x32x8xf32>
    tpu.vector_store %arg4[%c0_19, %c3, %c0_20, %c0_21], %21 {strides = array<i32>} : memref<1x4x32x8xf32, #tpu.memory_space<vmem>>, vector<1x1x32x8xf32>,
    return
  }
  func.func @transform_0(%arg0: i32) -> (i32, i32) {
    %c0_i32 = arith.constant 0 : i32
    %c0_i32_0 = arith.constant 0 : i32
    return %arg0, %c0_i32 : i32, i32
  }
  func.func @transform_1(%arg0: i32) -> (i32, i32) {
    %c0_i32 = arith.constant 0 : i32
    %c0_i32_0 = arith.constant 0 : i32
    %c0_i32_1 = arith.constant 0 : i32
    return %c0_i32, %c0_i32_0 : i32, i32
  }
  func.func @transform_2(%arg0: i32) -> (i32, i32) {
    %c0_i32 = arith.constant 0 : i32
    %c0_i32_0 = arith.constant 0 : i32
    %c0_i32_1 = arith.constant 0 : i32
    return %c0_i32, %c0_i32_0 : i32, i32
  }
  func.func @transform_3(%arg0: i32) -> (i32, i32, i32, i32) {
    %c0_i32 = arith.constant 0 : i32
    %c0_i32_0 = arith.constant 0 : i32
    %c0_i32_1 = arith.constant 0 : i32
    %c0_i32_2 = arith.constant 0 : i32
    return %arg0, %c0_i32, %c0_i32_0, %c0_i32_1 : i32, i32, i32, i32
  }
}

module attributes {stable_mosaic.version = 11 : i64} {
  func.func @kernel(%arg0: i32, %arg1: memref<32x32xf32, #tpu.memory_space<vmem>>, %arg2: memref<16x8xf32, #tpu.memory_space<vmem>>, %arg3: memref<16x8xf32, #tpu.memory_space<vmem>>, %arg4: memref<1x4x32x8xf32, #tpu.memory_space<vmem>>) attributes {dimension_semantics = [#tpu.dimension_semantics<parallel>], iteration_bounds = array<i64: 2>, scalar_prefetch = 0 : i64, scratch_operands = 0 : i64, tpu.core_type = #tpu.core_type<tc>, window_params = [{transform_indices = @transform_0, window_bounds = array<i64: 32, 32>}, {pipeline_mode = #tpu.pipeline_mode<synchronous>, transform_indices = @transform_1, window_bounds = array<i64: 16, 8>}, {pipeline_mode = #tpu.pipeline_mode<synchronous>, transform_indices = @transform_2, window_bounds = array<i64: 16, 8>}, {transform_indices = @transform_3, window_bounds = array<i64: 1, 4, 32, 8>}]} {
    %c0 = arith.constant 0 : index
    %c0_0 = arith.constant 0 : index
    %0 = vector.load %arg2[%c0, %c0_0] : memref<16x8xf32, #tpu.memory_space<vmem>>, vector<16x8xf32>
    %c0_1 = arith.constant 0 : index
    %c0_2 = arith.constant 0 : index
    %1 = vector.load %arg3[%c0_1, %c0_2] : memref<16x8xf32, #tpu.memory_space<vmem>>, vector<16x8xf32>
    %c0_3 = arith.constant 0 : index
    %c0_4 = arith.constant 0 : index
    %2 = vector.load %arg1[%c0_3, %c0_4] : memref<32x32xf32, #tpu.memory_space<vmem>>, vector<32x16xf32>
    %c0_5 = arith.constant 0 : index
    %c16 = arith.constant 16 : index
    %3 = vector.load %arg1[%c0_5, %c16] : memref<32x32xf32, #tpu.memory_space<vmem>>, vector<32x16xf32>
    %4 = arith.addf %2, %3 : vector<32x16xf32>
    %5 = arith.subf %3, %2 : vector<32x16xf32>
    %cst = arith.constant dense<0.000000e+00> : vector<32x8xf32>
    %6 = tpu.matmul %4, %0, %cst {dimension_numbers = #tpu.dot_dimension_numbers<[1], [0], [0], [1], [0, 0, 1, 1], [], []>} : vector<32x16xf32>, vector<16x8xf32>, vector<32x8xf32> -> vector<32x8xf32>
    %cst_6 = arith.constant dense<0.000000e+00> : vector<32x8xf32>
    %7 = tpu.matmul %4, %1, %cst_6 {dimension_numbers = #tpu.dot_dimension_numbers<[1], [0], [0], [1], [0, 0, 1, 1], [], []>} : vector<32x16xf32>, vector<16x8xf32>, vector<32x8xf32> -> vector<32x8xf32>
    %cst_7 = arith.constant dense<0.000000e+00> : vector<32x8xf32>
    %8 = tpu.matmul %5, %0, %cst_7 {dimension_numbers = #tpu.dot_dimension_numbers<[1], [0], [0], [1], [0, 0, 1, 1], [], []>} : vector<32x16xf32>, vector<16x8xf32>, vector<32x8xf32> -> vector<32x8xf32>
    %cst_8 = arith.constant dense<0.000000e+00> : vector<32x8xf32>
    %9 = tpu.matmul %5, %1, %cst_8 {dimension_numbers = #tpu.dot_dimension_numbers<[1], [0], [0], [1], [0, 0, 1, 1], [], []>} : vector<32x16xf32>, vector<16x8xf32>, vector<32x8xf32> -> vector<32x8xf32>
    %c0_9 = arith.constant 0 : index
    %c0_10 = arith.constant 0 : index
    %c0_11 = arith.constant 0 : index
    %c0_12 = arith.constant 0 : index
    %10 = vector.load %arg4[%c0_9, %c0_10, %c0_11, %c0_12] : memref<1x4x32x8xf32, #tpu.memory_space<vmem>>, vector<1x1x32x8xf32>
    %11 = vector.shape_cast %10 : vector<1x1x32x8xf32> to vector<32x8xf32>
    %12 = vector.shape_cast %6 : vector<32x8xf32> to vector<1x1x32x8xf32>
    tpu.vector_store %arg4[%c0_9, %c0_10, %c0_11, %c0_12], %12 {strides = array<i32>} : memref<1x4x32x8xf32, #tpu.memory_space<vmem>>, vector<1x1x32x8xf32>,
    %c0_13 = arith.constant 0 : index
    %c1 = arith.constant 1 : index
    %c0_14 = arith.constant 0 : index
    %c0_15 = arith.constant 0 : index
    %13 = vector.load %arg4[%c0_13, %c1, %c0_14, %c0_15] : memref<1x4x32x8xf32, #tpu.memory_space<vmem>>, vector<1x1x32x8xf32>
    %14 = vector.shape_cast %13 : vector<1x1x32x8xf32> to vector<32x8xf32>
    %15 = vector.shape_cast %7 : vector<32x8xf32> to vector<1x1x32x8xf32>
    tpu.vector_store %arg4[%c0_13, %c1, %c0_14, %c0_15], %15 {strides = array<i32>} : memref<1x4x32x8xf32, #tpu.memory_space<vmem>>, vector<1x1x32x8xf32>,
    %c0_16 = arith.constant 0 : index
    %c2 = arith.constant 2 : index
    %c0_17 = arith.constant 0 : index
    %c0_18 = arith.constant 0 : index
    %16 = vector.load %arg4[%c0_16, %c2, %c0_17, %c0_18] : memref<1x4x32x8xf32, #tpu.memory_space<vmem>>, vector<1x1x32x8xf32>
    %17 = vector.shape_cast %16 : vector<1x1x32x8xf32> to vector<32x8xf32>
    %18 = vector.shape_cast %8 : vector<32x8xf32> to vector<1x1x32x8xf32>
    tpu.vector_store %arg4[%c0_16, %c2, %c0_17, %c0_18], %18 {strides = array<i32>} : memref<1x4x32x8xf32, #tpu.memory_space<vmem>>, vector<1x1x32x8xf32>,
    %c0_19 = arith.constant 0 : index
    %c3 = arith.constant 3 : index
    %c0_20 = arith.constant 0 : index
    %c0_21 = arith.constant 0 : index
    %19 = vector.load %arg4[%c0_19, %c3, %c0_20, %c0_21] : memref<1x4x32x8xf32, #tpu.memory_space<vmem>>, vector<1x1x32x8xf32>
    %20 = vector.shape_cast %19 : vector<1x1x32x8xf32> to vector<32x8xf32>
    %21 = vector.shape_cast %9 : vector<32x8xf32> to vector<1x1x32x8xf32>
    tpu.vector_store %arg4[%c0_19, %c3, %c0_20, %c0_21], %21 {strides = array<i32>} : memref<1x4x32x8xf32, #tpu.memory_space<vmem>>, vector<1x1x32x8xf32>,
    return
  }
  func.func @transform_0(%arg0: i32) -> (i32, i32) {
    %c0_i32 = arith.constant 0 : i32
    %c0_i32_0 = arith.constant 0 : i32
    return %arg0, %c0_i32 : i32, i32
  }
  func.func @transform_1(%arg0: i32) -> (i32, i32) {
    %c0_i32 = arith.constant 0 : i32
    %c0_i32_0 = arith.constant 0 : i32
    %c0_i32_1 = arith.constant 0 : i32
    return %c0_i32, %c0_i32_0 : i32, i32
  }
  func.func @transform_2(%arg0: i32) -> (i32, i32) {
    %c0_i32 = arith.constant 0 : i32
    %c0_i32_0 = arith.constant 0 : i32
    %c0_i32_1 = arith.constant 0 : i32
    return %c0_i32, %c0_i32_0 : i32, i32
  }
  func.func @transform_3(%arg0: i32) -> (i32, i32, i32, i32) {
    %c0_i32 = arith.constant 0 : i32
    %c0_i32_0 = arith.constant 0 : i32
    %c0_i32_1 = arith.constant 0 : i32
    %c0_i32_2 = arith.constant 0 : i32
    return %arg0, %c0_i32, %c0_i32_0, %c0_i32_1 : i32, i32, i32, i32
  }
}

</mosaic_0001>

<llo_original>
// kernel: _dwt_impl.1
$region0: #{_dwt_impl.1}
  #allocation0 [shape = 'u32[]', space=smem, size = 0x4, offset = 0x4, fixed_abs, tag = 'smem constant byte address 0x4 - core index']
  #allocation1 [shape = 'u32[72,128]{1,0:T(1,128)}', space=vmem, size = 0x9000, scoped, tag = 'internal scratch']
  %s0 = inlined_call_operand.vmem [shape: f32[64,32], index: 0, kind: input, shape index: {}]
  %s1 = inlined_call_operand.vmem [shape: f32[16,8], index: 1, kind: input, shape index: {}]
  %s2 = inlined_call_operand.vmem [shape: f32[16,8], index: 2, kind: input, shape index: {}]
  %s3 = inlined_call_operand.vmem [shape: f32[2,4,32,8], index: 3, kind: output, shape index: {}]
  %s4 = sld [smem:[#allocation0]]
  $region45: #{_dwt_impl.1} parent=0
    _
  %s6 = ssub.s32 1, %s4
  %s7 = scalar_select 0, %s6, %s4
  loop: start=0, step=1, limit=4
  $region2: #{_dwt_impl.1} parent=0 // loop_pre_header
    _
  $region3: #{_dwt_impl.1} parent=0 // loop_header
    %s9 = sphi 0, %s13
    %p10 = scmp.ge.s32.totalorder %s9, 4
    %s19 = sphi 0, %s21
    %s22 = sphi 0, %s19
    %s23 = sphi 0, %s22
    %s39 = sphi 0, %s23
    %s43 = sphi 0, %s43
    %s45 = sphi 0, %s43
    %s46 = sphi 0, %s45
    %s60 = sphi 0, %s46
    %s64 = sphi 0, %s64
    %s66 = sphi 0, %s64
    %s67 = sphi 0, %s66
    %s81 = sphi 0, %s67
    %s87 = sphi 0, %s89
    %s90 = sphi 0, %s87
    %s91 = sphi 0, %s90
    %s107 = sphi 0, %s91
  $region4: #{_dwt_impl.1} parent=0 // loop_header_branch
    %12 = sbr.rel (%p10) target = $region8
  $region5: #{_dwt_impl.1} parent=0 // loop_body
    %s14 = ssub.s32 %s9, 1
    %s15 = ssub.s32 %s9, 2
    %s16 = sadd.s32 %s9, 1
    %s17 = ssub.s32 %s9, %s16
    %p18 = scmp.eq.s32.totalorder %s17, 0
    %s20 = sadd.s32 %s19, 1
    %s21 = scalar_select %p18, %s19, %s20
    %p24 = pneg %p18
    %p25 = scmp.eq.s32.totalorder %s9, 1
    %p26 = por %p24, %p25
    %p27 = scmp.ne.s32.totalorder %s19, %s22
    %p28 = scmp.eq.s32.totalorder %s9, 0
    %p29 = por %p27, %p28
    %p30 = scmp.ne.s32.totalorder %s19, %s22
    %p31 = scmp.eq.s32.totalorder %s14, 1
    %p32 = por %p30, %p31
    %p33 = scmp.ne.s32.totalorder %s22, %s23
    %p34 = scmp.eq.s32.totalorder %s14, 0
    %p35 = por %p33, %p34
    %p36 = scmp.ne.s32.totalorder %s22, %s23
    %p37 = scmp.eq.s32.totalorder %s15, 1
    %p38 = por %p36, %p37
    %p40 = scmp.ne.s32.totalorder %s23, %s39
    %p41 = scmp.eq.s32.totalorder %s15, 0
    %p42 = por %p40, %p41
    %s44 = sadd.s32 %s43, 1
    %p47 = scmp.eq.s32.totalorder %s9, 1
    %p48 = scmp.ne.s32.totalorder %s43, %s45
    %p49 = scmp.eq.s32.totalorder %s9, 0
    %p50 = por %p48, %p49
    %p51 = scmp.ne.s32.totalorder %s43, %s45
    %p52 = scmp.eq.s32.totalorder %s14, 1
    %p53 = por %p51, %p52
    %p54 = scmp.ne.s32.totalorder %s45, %s46
    %p55 = scmp.eq.s32.totalorder %s14, 0
    %p56 = por %p54, %p55
    %p57 = scmp.ne.s32.totalorder %s45, %s46
    %p58 = scmp.eq.s32.totalorder %s15, 1
    %p59 = por %p57, %p58
    %p61 = scmp.ne.s32.totalorder %s46, %s60
    %p62 = scmp.eq.s32.totalorder %s15, 0
    %p63 = por %p61, %p62
    %s65 = sadd.s32 %s64, 1
    %p68 = scmp.eq.s32.totalorder %s9, 1
    %p69 = scmp.ne.s32.totalorder %s64, %s66
    %p70 = scmp.eq.s32.totalorder %s9, 0
    %p71 = por %p69, %p70
    %p72 = scmp.ne.s32.totalorder %s64, %s66
    %p73 = scmp.eq.s32.totalorder %s14, 1
    %p74 = por %p72, %p73
    %p75 = scmp.ne.s32.totalorder %s66, %s67
    %p76 = scmp.eq.s32.totalorder %s14, 0
    %p77 = por %p75, %p76
    %p78 = scmp.ne.s32.totalorder %s66, %s67
    %p79 = scmp.eq.s32.totalorder %s15, 1
    %p80 = por %p78, %p79
    %p82 = scmp.ne.s32.totalorder %s67, %s81
    %p83 = scmp.eq.s32.totalorder %s15, 0
    %p84 = por %p82, %p83
    %s85 = ssub.s32 %s9, %s16
    %p86 = scmp.eq.s32.totalorder %s85, 0
    %s88 = sadd.s32 %s87, 1
    %s89 = scalar_select %p86, %s87, %s88
    %p92 = pneg %p86
    %p93 = scmp.eq.s32.totalorder %s9, 1
    %p94 = por %p92, %p93
    %p95 = scmp.ne.s32.totalorder %s87, %s90
    %p96 = scmp.eq.s32.totalorder %s9, 0
    %p97 = por %p95, %p96
    %p98 = scmp.ne.s32.totalorder %s87, %s90
    %p99 = scmp.eq.s32.totalorder %s14, 1
    %p100 = por %p98, %p99
    %p101 = scmp.ne.s32.totalorder %s90, %s91
    %p102 = scmp.eq.s32.totalorder %s14, 0
    %p103 = por %p101, %p102
    %p104 = scmp.ne.s32.totalorder %s90, %s91
    %p105 = scmp.eq.s32.totalorder %s15, 1
    %p106 = por %p104, %p105
    %p108 = scmp.ne.s32.totalorder %s91, %s107
    %p109 = scmp.eq.s32.totalorder %s15, 0
    %p110 = por %p108, %p109
    %p111 = scmp.le.s32.totalorder 1, %s9
    %p112 = scmp.lt.s32.totalorder %s9, 3
    %p113 = pnand %p111, %p112
    %p114 = pneg %p113
    // Predicated region
    $region9: #{_dwt_impl.1} parent=5 // pred_check
      _
    $region10: #{_dwt_impl.1} parent=5 // pred_check_branch
      %116 = sbr.rel (%p113) target = $region12
    $region11: #{_dwt_impl.1} parent=5 // pred_region
      %s117 = ssub.s32 %s9, 1
      // Predicated region
      $region13: #{_dwt_impl.1} parent=11 // pred_check
        %p118 = pneg %p56
      $region14: #{_dwt_impl.1} parent=11 // pred_check_branch
        %120 = sbr.rel (%p118) target = $region16
      $region15: #{_dwt_impl.1} parent=11 // pred_region
        _
      $region16: #{_dwt_impl.1} parent=11 // pred_fallthru
        _
      // Predicated region
      $region17: #{_dwt_impl.1} parent=11 // pred_check
        %p121 = pneg %p77
      $region18: #{_dwt_impl.1} parent=11 // pred_check_branch
        %123 = sbr.rel (%p121) target = $region20
      $region19: #{_dwt_impl.1} parent=11 // pred_region
        _
      $region20: #{_dwt_impl.1} parent=11 // pred_fallthru
        _
    $region12: #{_dwt_impl.1} parent=5 // pred_fallthru
      _
    %p124 = scmp.lt.s32.totalorder %s9, 2
    // Predicated region
    $region21: #{_dwt_impl.1} parent=5 // pred_check
      %p125 = pneg %p124
    $region22: #{_dwt_impl.1} parent=5 // pred_check_branch
      %127 = sbr.rel (%p125) target = $region24
    $region23: #{_dwt_impl.1} parent=5 // pred_region
      // Predicated region
      $region25: #{_dwt_impl.1} parent=23 // pred_check
        %p128 = pneg %p29
      $region26: #{_dwt_impl.1} parent=23 // pred_check_branch
        %130 = sbr.rel (%p128) target = $region28
      $region27: #{_dwt_impl.1} parent=23 // pred_region
        %s131 = smul.u32 4, %s9
        %p132 = scmp.lt.s32.totalorder %s131, 7
        %s133 = scalar_select %p132, %s131, 7
        %s134 = smul.addr %s133, 8
        %s135 = scalar_lea.vmem %s0, %s134
        %s136 = smul.u32 4, %s9
      $region28: #{_dwt_impl.1} parent=23 // pred_fallthru
        _
    $region24: #{_dwt_impl.1} parent=5 // pred_fallthru
      _
    %p137 = scmp.le.s32.totalorder 1, %s9
    %p138 = scmp.lt.s32.totalorder %s9, 3
    %p139 = pnand %p137, %p138
    %p140 = pneg %p139
    // Predicated region
    $region29: #{_dwt_impl.1} parent=5 // pred_check
      _
    $region30: #{_dwt_impl.1} parent=5 // pred_check_branch
      %142 = sbr.rel (%p139) target = $region32
    $region31: #{_dwt_impl.1} parent=5 // pred_region
      %s143 = ssub.s32 %s9, 1
      %s144 = smul.u32 4, %s14
      %p145 = scmp.lt.s32.totalorder %s144, 7
      %s146 = scalar_select %p145, %s144, 7
      %s147 = smul.addr %s146, 8
      %s148 = scalar_lea.vmem %s0, %s147
      %p149 = pneg %p35
      %p150 = pneg %p32
      %p151 = pneg %p56
      %p152 = pneg %p53
      %p153 = pneg %p77
      %p154 = pneg %p74
      %p155 = pneg %p103
      %p156 = pneg %p100
      %p157 = scmp.lt.s32.totalorder %s14, 1
      %s158 = scalar_select %p157, %s14, 1
      %s159 = smul.addr %s158, 16
      %s160 = smul.addr %s159, 8
      %s161 = scalar_lea.vmem %s3, %s160
      %s162 = smul.u32 4, %s14
      %p163 = scmp.lt.s32.totalorder %s162, 7
      %s164 = scalar_select %p163, %s162, 7
      %s165 = smul.addr %s164, 8
      %s166 = scalar_lea.vmem %s0, %s165
      %s167 = smul.u32 4, %s14
      %p168 = scmp.lt.s32.totalorder %s14, 1
      %s169 = scalar_select %p168, %s14, 1
      %s170 = smul.addr %s169, 16
      %s171 = smul.addr %s170, 8
      %s172 = scalar_lea.vmem %s3, %s171
      %v173 = vld [vmem:[%s1] sm:$0xff]
      %v174 = vld [vmem:[%s1 + $0x8] sm:$0xff]
      %v175 = vld [vmem:[%s2] sm:$0xff]
      %v176 = vld [vmem:[%s2 + $0x8] sm:$0xff]
      %v177 = vld [vmem:[%s166] sm:$0xff]
      %v178 = vld [vmem:[%s166 + $0x8] sm:$0xff]
      %v179 = vld [vmem:[%s166 + $0x10] sm:$0xff]
      %v180 = vld [vmem:[%s166 + $0x18] sm:$0xff]
      %185 = vrot.lane.b32.xlu0 %v177, 112
      %v186 = vpop.permute.xlu0 %185
      %187 = vrot.lane.b32.xlu0 %v178, 112
      %v188 = vpop.permute.xlu0 %187
      %189 = vrot.lane.b32.xlu0 %v179, 112
      %v190 = vpop.permute.xlu0 %189
      %191 = vrot.lane.b32.xlu0 %v180, 112
      %v192 = vpop.permute.xlu0 %191
      %v197 = vadd.f32 %v177, %v186
      %v198 = vadd.f32 %v178, %v188
      %v199 = vadd.f32 %v179, %v190
      %v200 = vadd.f32 %v180, %v192
      %201 = vrot.lane.b32.xlu0 %v177, 16
      %v202 = vpop.permute.xlu0 %201
      %203 = vrot.lane.b32.xlu0 %v178, 16
      %v204 = vpop.permute.xlu0 %203
      %205 = vrot.lane.b32.xlu0 %v179, 16
      %v206 = vpop.permute.xlu0 %205
      %207 = vrot.lane.b32.xlu0 %v180, 16
      %v208 = vpop.permute.xlu0 %207
      %v213 = vsub.f32 %v177, %v202
      %v214 = vsub.f32 %v178, %v204
      %v215 = vsub.f32 %v179, %v206
      %v216 = vsub.f32 %v180, %v208
      %vm217 = vcmask 130048
      %v219 = vsel %vm217, %v197, 0
      %v222 = vsel %vm217, %v198, 0
      %v225 = vsel %vm217, %v199, 0
      %v228 = vsel %vm217, %v200, 0
      %230 = vmatpush.msra.mxu0 0.0
      %231 = vmatpush.msra.mxu0 0.0
      %232 = vmatpush.msra.mxu0 0.0
      %233 = vmatpush.msra.mxu0 0.0
      %234 = vmatpush.msra.mxu0 0.0
      %235 = vmatpush.msra.mxu0 0.0
      %236 = vmatpush.msra.mxu0 0.0
      %237 = vmatpush.msra.mxu0 0.0
      %238 = vmatpush.msra.mxu0 0.0
      %239 = vmatpush.msra.mxu0 0.0
      %240 = vmatpush.msra.mxu0 0.0
      %241 = vmatpush.msra.mxu0 0.0
      %242 = vmatpush.msra.mxu0 0.0
      %243 = vmatpush.msra.mxu0 0.0
      %v244 = vand.u32 %v174, 4294901760
      %245 = vmatpush.msra.mxu0 %v244
      %v246 = vand.u32 %v173, 4294901760
      %247 = vmatpush.msra.mxu0 %v246
      %v248 = vand.u32 %v219, 4294901760
      %v249 = vsub.f32 %v219, %v248
      %v250 = vand.u32 %v249, 4294901760
      %v251 = vsub.f32 %v249, %v250
      %v252 = vand.u32 %v251, 4294901760
      %253 = vmatmul.f32.gmra.mxu0 %v252
      %v254 = vpop.f32.mrf.mxu0
      %v255 = vadd.f32 0.0, %v254
      %v256 = vand.u32 %v222, 4294901760
      %v257 = vsub.f32 %v222, %v256
      %v258 = vand.u32 %v257, 4294901760
      %v259 = vsub.f32 %v257, %v258
      %v260 = vand.u32 %v259, 4294901760
      %261 = vmatmul.f32.gmra.mxu0 %v260
      %v262 = vpop.f32.mrf.mxu0
      %v263 = vadd.f32 0.0, %v262
      %v264 = vand.u32 %v225, 4294901760
      %v265 = vsub.f32 %v225, %v264
      %v266 = vand.u32 %v265, 4294901760
      %v267 = vsub.f32 %v265, %v266
      %v268 = vand.u32 %v267, 4294901760
      %269 = vmatmul.f32.gmra.mxu0 %v268
      %v270 = vpop.f32.mrf.mxu0
      %v271 = vadd.f32 0.0, %v270
      %v272 = vand.u32 %v228, 4294901760
      %v273 = vsub.f32 %v228, %v272
      %v274 = vand.u32 %v273, 4294901760
      %v275 = vsub.f32 %v273, %v274
      %v276 = vand.u32 %v275, 4294901760
      %277 = vmatmul.f32.gmra.mxu0 %v276
      %v278 = vpop.f32.mrf.mxu0
      %v279 = vadd.f32 0.0, %v278
      %280 = vdwg.mxu0
      %281 = vmatpush.msra.mxu0 0.0
      %282 = vmatpush.msra.mxu0 0.0
      %283 = vmatpush.msra.mxu0 0.0
      %284 = vmatpush.msra.mxu0 0.0
      %285 = vmatpush.msra.mxu0 0.0
      %286 = vmatpush.msra.mxu0 0.0
      %287 = vmatpush.msra.mxu0 0.0
      %288 = vmatpush.msra.mxu0 0.0
      %289 = vmatpush.msra.mxu0 0.0
      %290 = vmatpush.msra.mxu0 0.0
      %291 = vmatpush.msra.mxu0 0.0
      %292 = vmatpush.msra.mxu0 0.0
      %293 = vmatpush.msra.mxu0 0.0
      %294 = vmatpush.msra.mxu0 0.0
      %v295 = vand.u32 %v174, 4294901760
      %v296 = vsub.f32 %v174, %v295
      %v297 = vand.u32 %v296, 4294901760
      %v298 = vsub.f32 %v296, %v297
      %v299 = vand.u32 %v298, 4294901760
      %300 = vmatpush.msra.mxu0 %v299
      %v301 = vand.u32 %v173, 4294901760
      %v302 = vsub.f32 %v173, %v301
      %v303 = vand.u32 %v302, 4294901760
      %v304 = vsub.f32 %v302, %v303
      %v305 = vand.u32 %v304, 4294901760
      %306 = vmatpush.msra.mxu0 %v305
      %v307 = vand.u32 %v219, 4294901760
      %308 = vmatmul.f32.gmra.mxu0 %v307
      %v309 = vpop.f32.mrf.mxu0
      %v310 = vadd.f32 %v255, %v309
      %v311 = vand.u32 %v222, 4294901760
      %312 = vmatmul.f32.gmra.mxu0 %v311
      %v313 = vpop.f32.mrf.mxu0
      %v314 = vadd.f32 %v263, %v313
      %v315 = vand.u32 %v225, 4294901760
      %316 = vmatmul.f32.gmra.mxu0 %v315
      %v317 = vpop.f32.mrf.mxu0
      %v318 = vadd.f32 %v271, %v317
      %v319 = vand.u32 %v228, 4294901760
      %320 = vmatmul.f32.gmra.mxu0 %v319
      %v321 = vpop.f32.mrf.mxu0
      %v322 = vadd.f32 %v279, %v321
      %323 = vdwg.mxu0
      %324 = vmatpush.msra.mxu0 0.0
      %325 = vmatpush.msra.mxu0 0.0
      %326 = vmatpush.msra.mxu0 0.0
      %327 = vmatpush.msra.mxu0 0.0
      %328 = vmatpush.msra.mxu0 0.0
      %329 = vmatpush.msra.mxu0 0.0
      %330 = vmatpush.msra.mxu0 0.0
      %331 = vmatpush.msra.mxu0 0.0
      %332 = vmatpush.msra.mxu0 0.0
      %333 = vmatpush.msra.mxu0 0.0
      %334 = vmatpush.msra.mxu0 0.0
      %335 = vmatpush.msra.mxu0 0.0
      %336 = vmatpush.msra.mxu0 0.0
      %337 = vmatpush.msra.mxu0 0.0
      %v338 = vand.u32 %v174, 4294901760
      %v339 = vsub.f32 %v174, %v338
      %340 = vmatpush.msra.mxu0 %v339
      %v341 = vand.u32 %v173, 4294901760
      %v342 = vsub.f32 %v173, %v341
      %343 = vmatpush.msra.mxu0 %v342
      %v344 = vand.u32 %v219, 4294901760
      %v345 = vsub.f32 %v219, %v344
      %346 = vmatmul.f32.gmra.mxu0 %v345
      %v347 = vpop.f32.mrf.mxu0
      %v348 = vadd.f32 %v310, %v347
      %v349 = vand.u32 %v222, 4294901760
      %v350 = vsub.f32 %v222, %v349
      %351 = vmatmul.f32.gmra.mxu0 %v350
      %v352 = vpop.f32.mrf.mxu0
      %v353 = vadd.f32 %v314, %v352
      %v354 = vand.u32 %v225, 4294901760
      %v355 = vsub.f32 %v225, %v354
      %356 = vmatmul.f32.gmra.mxu0 %v355
      %v357 = vpop.f32.mrf.mxu0
      %v358 = vadd.f32 %v318, %v357
      %v359 = vand.u32 %v228, 4294901760
      %v360 = vsub.f32 %v228, %v359
      %361 = vmatmul.f32.gmra.mxu0 %v360
      %v362 = vpop.f32.mrf.mxu0
      %v363 = vadd.f32 %v322, %v362
      %364 = vdwg.mxu0
      %365 = vmatpush.msra.mxu0 0.0
      %366 = vmatpush.msra.mxu0 0.0
      %367 = vmatpush.msra.mxu0 0.0
      %368 = vmatpush.msra.mxu0 0.0
      %369 = vmatpush.msra.mxu0 0.0
      %370 = vmatpush.msra.mxu0 0.0
      %371 = vmatpush.msra.mxu0 0.0
      %372 = vmatpush.msra.mxu0 0.0
      %373 = vmatpush.msra.mxu0 0.0
      %374 = vmatpush.msra.mxu0 0.0
      %375 = vmatpush.msra.mxu0 0.0
      %376 = vmatpush.msra.mxu0 0.0
      %377 = vmatpush.msra.mxu0 0.0
      %378 = vmatpush.msra.mxu0 0.0
      %v379 = vand.u32 %v174, 4294901760
      %380 = vmatpush.msra.mxu0 %v379
      %v381 = vand.u32 %v173, 4294901760
      %382 = vmatpush.msra.mxu0 %v381
      %v383 = vand.u32 %v219, 4294901760
      %v384 = vsub.f32 %v219, %v383
      %v385 = vand.u32 %v384, 4294901760
      %386 = vmatmul.f32.gmra.mxu0 %v385
      %v387 = vpop.f32.mrf.mxu0
      %v388 = vadd.f32 %v348, %v387
      %v389 = vand.u32 %v222, 4294901760
      %v390 = vsub.f32 %v222, %v389
      %v391 = vand.u32 %v390, 4294901760
      %392 = vmatmul.f32.gmra.mxu0 %v391
      %v393 = vpop.f32.mrf.mxu0
      %v394 = vadd.f32 %v353, %v393
      %v395 = vand.u32 %v225, 4294901760
      %v396 = vsub.f32 %v225, %v395
      %v397 = vand.u32 %v396, 4294901760
      %398 = vmatmul.f32.gmra.mxu0 %v397
      %v399 = vpop.f32.mrf.mxu0
      %v400 = vadd.f32 %v358, %v399
      %v401 = vand.u32 %v228, 4294901760
      %v402 = vsub.f32 %v228, %v401
      %v403 = vand.u32 %v402, 4294901760
      %404 = vmatmul.f32.gmra.mxu0 %v403
      %v405 = vpop.f32.mrf.mxu0
      %v406 = vadd.f32 %v363, %v405
      %407 = vdwg.mxu0
      %408 = vmatpush.msra.mxu0 0.0
      %409 = vmatpush.msra.mxu0 0.0
      %410 = vmatpush.msra.mxu0 0.0
      %411 = vmatpush.msra.mxu0 0.0
      %412 = vmatpush.msra.mxu0 0.0
      %413 = vmatpush.msra.mxu0 0.0
      %414 = vmatpush.msra.mxu0 0.0
      %415 = vmatpush.msra.mxu0 0.0
      %416 = vmatpush.msra.mxu0 0.0
      %417 = vmatpush.msra.mxu0 0.0
      %418 = vmatpush.msra.mxu0 0.0
      %419 = vmatpush.msra.mxu0 0.0
      %420 = vmatpush.msra.mxu0 0.0
      %421 = vmatpush.msra.mxu0 0.0
      %v422 = vand.u32 %v174, 4294901760
      %v423 = vsub.f32 %v174, %v422
      %v424 = vand.u32 %v423, 4294901760
      %425 = vmatpush.msra.mxu0 %v424
      %v426 = vand.u32 %v173, 4294901760
      %v427 = vsub.f32 %v173, %v426
      %v428 = vand.u32 %v427, 4294901760
      %429 = vmatpush.msra.mxu0 %v428
      %v430 = vand.u32 %v219, 4294901760
      %431 = vmatmul.f32.gmra.mxu0 %v430
      %v432 = vpop.f32.mrf.mxu0
      %v433 = vadd.f32 %v388, %v432
      %v434 = vand.u32 %v222, 4294901760
      %435 = vmatmul.f32.gmra.mxu0 %v434
      %v436 = vpop.f32.mrf.mxu0
      %v437 = vadd.f32 %v394, %v436
      %v438 = vand.u32 %v225, 4294901760
      %439 = vmatmul.f32.gmra.mxu0 %v438
      %v440 = vpop.f32.mrf.mxu0
      %v441 = vadd.f32 %v400, %v440
      %v442 = vand.u32 %v228, 4294901760
      %443 = vmatmul.f32.gmra.mxu0 %v442
      %v444 = vpop.f32.mrf.mxu0
      %v445 = vadd.f32 %v406, %v444
      %446 = vdwg.mxu0
      %447 = vmatpush.msra.mxu0 0.0
      %448 = vmatpush.msra.mxu0 0.0
      %449 = vmatpush.msra.mxu0 0.0
      %450 = vmatpush.msra.mxu0 0.0
      %451 = vmatpush.msra.mxu0 0.0
      %452 = vmatpush.msra.mxu0 0.0
      %453 = vmatpush.msra.mxu0 0.0
      %454 = vmatpush.msra.mxu0 0.0
      %455 = vmatpush.msra.mxu0 0.0
      %456 = vmatpush.msra.mxu0 0.0
      %457 = vmatpush.msra.mxu0 0.0
      %458 = vmatpush.msra.mxu0 0.0
      %459 = vmatpush.msra.mxu0 0.0
      %460 = vmatpush.msra.mxu0 0.0
      %v461 = vand.u32 %v174, 4294901760
      %462 = vmatpush.msra.mxu0 %v461
      %v463 = vand.u32 %v173, 4294901760
      %464 = vmatpush.msra.mxu0 %v463
      %v465 = vand.u32 %v219, 4294901760
      %466 = vmatmul.f32.gmra.mxu0 %v465
      %v467 = vpop.f32.mrf.mxu0
      %v468 = vadd.f32 %v433, %v467
      %v469 = vand.u32 %v222, 4294901760
      %470 = vmatmul.f32.gmra.mxu0 %v469
      %v471 = vpop.f32.mrf.mxu0
      %v472 = vadd.f32 %v437, %v471
      %v473 = vand.u32 %v225, 4294901760
      %474 = vmatmul.f32.gmra.mxu0 %v473
      %v475 = vpop.f32.mrf.mxu0
      %v476 = vadd.f32 %v441, %v475
      %v477 = vand.u32 %v228, 4294901760
      %478 = vmatmul.f32.gmra.mxu0 %v477
      %v479 = vpop.f32.mrf.mxu0
      %v480 = vadd.f32 %v445, %v479
      %481 = vdwg.mxu0
      %482 = vmatpush.msra.mxu0 0.0
      %483 = vmatpush.msra.mxu0 0.0
      %484 = vmatpush.msra.mxu0 0.0
      %485 = vmatpush.msra.mxu0 0.0
      %486 = vmatpush.msra.mxu0 0.0
      %487 = vmatpush.msra.mxu0 0.0
      %488 = vmatpush.msra.mxu0 0.0
      %489 = vmatpush.msra.mxu0 0.0
      %490 = vmatpush.msra.mxu0 0.0
      %491 = vmatpush.msra.mxu0 0.0
      %492 = vmatpush.msra.mxu0 0.0
      %493 = vmatpush.msra.mxu0 0.0
      %494 = vmatpush.msra.mxu0 0.0
      %495 = vmatpush.msra.mxu0 0.0
      %v496 = vand.u32 %v176, 4294901760
      %497 = vmatpush.msra.mxu0 %v496
      %v498 = vand.u32 %v175, 4294901760
      %499 = vmatpush.msra.mxu0 %v498
      %v500 = vand.u32 %v219, 4294901760
      %v501 = vsub.f32 %v219, %v500
      %v502 = vand.u32 %v501, 4294901760
      %v503 = vsub.f32 %v501, %v502
      %v504 = vand.u32 %v503, 4294901760
      %505 = vmatmul.f32.gmra.mxu0 %v504
      %v506 = vpop.f32.mrf.mxu0
      %v507 = vadd.f32 0.0, %v506
      %v508 = vand.u32 %v222, 4294901760
      %v509 = vsub.f32 %v222, %v508
      %v510 = vand.u32 %v509, 4294901760
      %v511 = vsub.f32 %v509, %v510
      %v512 = vand.u32 %v511, 4294901760
      %513 = vmatmul.f32.gmra.mxu0 %v512
      %v514 = vpop.f32.mrf.mxu0
      %v515 = vadd.f32 0.0, %v514
      %v516 = vand.u32 %v225, 4294901760
      %v517 = vsub.f32 %v225, %v516
      %v518 = vand.u32 %v517, 4294901760
      %v519 = vsub.f32 %v517, %v518
      %v520 = vand.u32 %v519, 4294901760
      %521 = vmatmul.f32.gmra.mxu0 %v520
      %v522 = vpop.f32.mrf.mxu0
      %v523 = vadd.f32 0.0, %v522
      %v524 = vand.u32 %v228, 4294901760
      %v525 = vsub.f32 %v228, %v524
      %v526 = vand.u32 %v525, 4294901760
      %v527 = vsub.f32 %v525, %v526
      %v528 = vand.u32 %v527, 4294901760
      %529 = vmatmul.f32.gmra.mxu0 %v528
      %v530 = vpop.f32.mrf.mxu0
      %v531 = vadd.f32 0.0, %v530
      %532 = vdwg.mxu0
      %533 = vmatpush.msra.mxu0 0.0
      %534 = vmatpush.msra.mxu0 0.0
      %535 = vmatpush.msra.mxu0 0.0
      %536 = vmatpush.msra.mxu0 0.0
      %537 = vmatpush.msra.mxu0 0.0
      %538 = vmatpush.msra.mxu0 0.0
      %539 = vmatpush.msra.mxu0 0.0
      %540 = vmatpush.msra.mxu0 0.0
      %541 = vmatpush.msra.mxu0 0.0
      %542 = vmatpush.msra.mxu0 0.0
      %543 = vmatpush.msra.mxu0 0.0
      %544 = vmatpush.msra.mxu0 0.0
      %545 = vmatpush.msra.mxu0 0.0
      %546 = vmatpush.msra.mxu0 0.0
      %v547 = vand.u32 %v176, 4294901760
      %v548 = vsub.f32 %v176, %v547
      %v549 = vand.u32 %v548, 4294901760
      %v550 = vsub.f32 %v548, %v549
      %v551 = vand.u32 %v550, 4294901760
      %552 = vmatpush.msra.mxu0 %v551
      %v553 = vand.u32 %v175, 4294901760
      %v554 = vsub.f32 %v175, %v553
      %v555 = vand.u32 %v554, 4294901760
      %v556 = vsub.f32 %v554, %v555
      %v557 = vand.u32 %v556, 4294901760
      %558 = vmatpush.msra.mxu0 %v557
      %v559 = vand.u32 %v219, 4294901760
      %560 = vmatmul.f32.gmra.mxu0 %v559
      %v561 = vpop.f32.mrf.mxu0
      %v562 = vadd.f32 %v507, %v561
      %v563 = vand.u32 %v222, 4294901760
      %564 = vmatmul.f32.gmra.mxu0 %v563
      %v565 = vpop.f32.mrf.mxu0
      %v566 = vadd.f32 %v515, %v565
      %v567 = vand.u32 %v225, 4294901760
      %568 = vmatmul.f32.gmra.mxu0 %v567
      %v569 = vpop.f32.mrf.mxu0
      %v570 = vadd.f32 %v523, %v569
      %v571 = vand.u32 %v228, 4294901760
      %572 = vmatmul.f32.gmra.mxu0 %v571
      %v573 = vpop.f32.mrf.mxu0
      %v574 = vadd.f32 %v531, %v573
      %575 = vdwg.mxu0
      %576 = vmatpush.msra.mxu0 0.0
      %577 = vmatpush.msra.mxu0 0.0
      %578 = vmatpush.msra.mxu0 0.0
      %579 = vmatpush.msra.mxu0 0.0
      %580 = vmatpush.msra.mxu0 0.0
      %581 = vmatpush.msra.mxu0 0.0
      %582 = vmatpush.msra.mxu0 0.0
      %583 = vmatpush.msra.mxu0 0.0
      %584 = vmatpush.msra.mxu0 0.0
      %585 = vmatpush.msra.mxu0 0.0
      %586 = vmatpush.msra.mxu0 0.0
      %587 = vmatpush.msra.mxu0 0.0
      %588 = vmatpush.msra.mxu0 0.0
      %589 = vmatpush.msra.mxu0 0.0
      %v590 = vand.u32 %v176, 4294901760
      %v591 = vsub.f32 %v176, %v590
      %592 = vmatpush.msra.mxu0 %v591
      %v593 = vand.u32 %v175, 4294901760
      %v594 = vsub.f32 %v175, %v593
      %595 = vmatpush.msra.mxu0 %v594
      %v596 = vand.u32 %v219, 4294901760
      %v597 = vsub.f32 %v219, %v596
      %598 = vmatmul.f32.gmra.mxu0 %v597
      %v599 = vpop.f32.mrf.mxu0
      %v600 = vadd.f32 %v562, %v599
      %v601 = vand.u32 %v222, 4294901760
      %v602 = vsub.f32 %v222, %v601
      %603 = vmatmul.f32.gmra.mxu0 %v602
      %v604 = vpop.f32.mrf.mxu0
      %v605 = vadd.f32 %v566, %v604
      %v606 = vand.u32 %v225, 4294901760
      %v607 = vsub.f32 %v225, %v606
      %608 = vmatmul.f32.gmra.mxu0 %v607
      %v609 = vpop.f32.mrf.mxu0
      %v610 = vadd.f32 %v570, %v609
      %v611 = vand.u32 %v228, 4294901760
      %v612 = vsub.f32 %v228, %v611
      %613 = vmatmul.f32.gmra.mxu0 %v612
      %v614 = vpop.f32.mrf.mxu0
      %v615 = vadd.f32 %v574, %v614
      %616 = vdwg.mxu0
      %617 = vmatpush.msra.mxu0 0.0
      %618 = vmatpush.msra.mxu0 0.0
      %619 = vmatpush.msra.mxu0 0.0
      %620 = vmatpush.msra.mxu0 0.0
      %621 = vmatpush.msra.mxu0 0.0
      %622 = vmatpush.msra.mxu0 0.0
      %623 = vmatpush.msra.mxu0 0.0
      %624 = vmatpush.msra.mxu0 0.0
      %625 = vmatpush.msra.mxu0 0.0
      %626 = vmatpush.msra.mxu0 0.0
      %627 = vmatpush.msra.mxu0 0.0
      %628 = vmatpush.msra.mxu0 0.0
      %629 = vmatpush.msra.mxu0 0.0
      %630 = vmatpush.msra.mxu0 0.0
      %v631 = vand.u32 %v176, 4294901760
      %632 = vmatpush.msra.mxu0 %v631
      %v633 = vand.u32 %v175, 4294901760
      %634 = vmatpush.msra.mxu0 %v633
      %v635 = vand.u32 %v219, 4294901760
      %v636 = vsub.f32 %v219, %v635
      %v637 = vand.u32 %v636, 4294901760
      %638 = vmatmul.f32.gmra.mxu0 %v637
      %v639 = vpop.f32.mrf.mxu0
      %v640 = vadd.f32 %v600, %v639
      %v641 = vand.u32 %v222, 4294901760
      %v642 = vsub.f32 %v222, %v641
      %v643 = vand.u32 %v642, 4294901760
      %644 = vmatmul.f32.gmra.mxu0 %v643
      %v645 = vpop.f32.mrf.mxu0
      %v646 = vadd.f32 %v605, %v645
      %v647 = vand.u32 %v225, 4294901760
      %v648 = vsub.f32 %v225, %v647
      %v649 = vand.u32 %v648, 4294901760
      %650 = vmatmul.f32.gmra.mxu0 %v649
      %v651 = vpop.f32.mrf.mxu0
      %v652 = vadd.f32 %v610, %v651
      %v653 = vand.u32 %v228, 4294901760
      %v654 = vsub.f32 %v228, %v653
      %v655 = vand.u32 %v654, 4294901760
      %656 = vmatmul.f32.gmra.mxu0 %v655
      %v657 = vpop.f32.mrf.mxu0
      %v658 = vadd.f32 %v615, %v657
      %659 = vdwg.mxu0
      %660 = vmatpush.msra.mxu0 0.0
      %661 = vmatpush.msra.mxu0 0.0
      %662 = vmatpush.msra.mxu0 0.0
      %663 = vmatpush.msra.mxu0 0.0
      %664 = vmatpush.msra.mxu0 0.0
      %665 = vmatpush.msra.mxu0 0.0
      %666 = vmatpush.msra.mxu0 0.0
      %667 = vmatpush.msra.mxu0 0.0
      %668 = vmatpush.msra.mxu0 0.0
      %669 = vmatpush.msra.mxu0 0.0
      %670 = vmatpush.msra.mxu0 0.0
      %671 = vmatpush.msra.mxu0 0.0
      %672 = vmatpush.msra.mxu0 0.0
      %673 = vmatpush.msra.mxu0 0.0
      %v674 = vand.u32 %v176, 4294901760
      %v675 = vsub.f32 %v176, %v674
      %v676 = vand.u32 %v675, 4294901760
      %677 = vmatpush.msra.mxu0 %v676
      %v678 = vand.u32 %v175, 4294901760
      %v679 = vsub.f32 %v175, %v678
      %v680 = vand.u32 %v679, 4294901760
      %681 = vmatpush.msra.mxu0 %v680
      %v682 = vand.u32 %v219, 4294901760
      %683 = vmatmul.f32.gmra.mxu0 %v682
      %v684 = vpop.f32.mrf.mxu0
      %v685 = vadd.f32 %v640, %v684
      %v686 = vand.u32 %v222, 4294901760
      %687 = vmatmul.f32.gmra.mxu0 %v686
      %v688 = vpop.f32.mrf.mxu0
      %v689 = vadd.f32 %v646, %v688
      %v690 = vand.u32 %v225, 4294901760
      %691 = vmatmul.f32.gmra.mxu0 %v690
      %v692 = vpop.f32.mrf.mxu0
      %v693 = vadd.f32 %v652, %v692
      %v694 = vand.u32 %v228, 4294901760
      %695 = vmatmul.f32.gmra.mxu0 %v694
      %v696 = vpop.f32.mrf.mxu0
      %v697 = vadd.f32 %v658, %v696
      %698 = vdwg.mxu0
      %699 = vmatpush.msra.mxu0 0.0
      %700 = vmatpush.msra.mxu0 0.0
      %701 = vmatpush.msra.mxu0 0.0
      %702 = vmatpush.msra.mxu0 0.0
      %703 = vmatpush.msra.mxu0 0.0
      %704 = vmatpush.msra.mxu0 0.0
      %705 = vmatpush.msra.mxu0 0.0
      %706 = vmatpush.msra.mxu0 0.0
      %707 = vmatpush.msra.mxu0 0.0
      %708 = vmatpush.msra.mxu0 0.0
      %709 = vmatpush.msra.mxu0 0.0
      %710 = vmatpush.msra.mxu0 0.0
      %711 = vmatpush.msra.mxu0 0.0
      %712 = vmatpush.msra.mxu0 0.0
      %v713 = vand.u32 %v176, 4294901760
      %714 = vmatpush.msra.mxu0 %v713
      %v715 = vand.u32 %v175, 4294901760
      %716 = vmatpush.msra.mxu0 %v715
      %v717 = vand.u32 %v219, 4294901760
      %718 = vmatmul.f32.gmra.mxu0 %v717
      %v719 = vpop.f32.mrf.mxu0
      %v720 = vadd.f32 %v685, %v719
      %v721 = vand.u32 %v222, 4294901760
      %722 = vmatmul.f32.gmra.mxu0 %v721
      %v723 = vpop.f32.mrf.mxu0
      %v724 = vadd.f32 %v689, %v723
      %v725 = vand.u32 %v225, 4294901760
      %726 = vmatmul.f32.gmra.mxu0 %v725
      %v727 = vpop.f32.mrf.mxu0
      %v728 = vadd.f32 %v693, %v727
      %v729 = vand.u32 %v228, 4294901760
      %730 = vmatmul.f32.gmra.mxu0 %v729
      %v731 = vpop.f32.mrf.mxu0
      %v732 = vadd.f32 %v697, %v731
      %733 = vdwg.mxu0
      %738 = vrot.lane.b32.xlu0 %v213, 112
      %v739 = vpop.permute.xlu0 %738
      %740 = vrot.lane.b32.xlu0 %v214, 112
      %v741 = vpop.permute.xlu0 %740
      %742 = vrot.lane.b32.xlu0 %v215, 112
      %v743 = vpop.permute.xlu0 %742
      %744 = vrot.lane.b32.xlu0 %v216, 112
      %v745 = vpop.permute.xlu0 %744
      %v746 = vsel %vm217, %v739, 0
      %v748 = vsel %vm217, %v741, 0
      %v750 = vsel %vm217, %v743, 0
      %v752 = vsel %vm217, %v745, 0
      %754 = vmatpush.msra.mxu0 0.0
      %755 = vmatpush.msra.mxu0 0.0
      %756 = vmatpush.msra.mxu0 0.0
      %757 = vmatpush.msra.mxu0 0.0
      %758 = vmatpush.msra.mxu0 0.0
      %759 = vmatpush.msra.mxu0 0.0
      %760 = vmatpush.msra.mxu0 0.0
      %761 = vmatpush.msra.mxu0 0.0
      %762 = vmatpush.msra.mxu0 0.0
      %763 = vmatpush.msra.mxu0 0.0
      %764 = vmatpush.msra.mxu0 0.0
      %765 = vmatpush.msra.mxu0 0.0
      %766 = vmatpush.msra.mxu0 0.0
      %767 = vmatpush.msra.mxu0 0.0
      %v768 = vand.u32 %v174, 4294901760
      %769 = vmatpush.msra.mxu0 %v768
      %v770 = vand.u32 %v173, 4294901760
      %771 = vmatpush.msra.mxu0 %v770
      %v772 = vand.u32 %v746, 4294901760
      %v773 = vsub.f32 %v746, %v772
      %v774 = vand.u32 %v773, 4294901760
      %v775 = vsub.f32 %v773, %v774
      %v776 = vand.u32 %v775, 4294901760
      %777 = vmatmul.f32.gmra.mxu0 %v776
      %v778 = vpop.f32.mrf.mxu0
      %v779 = vadd.f32 0.0, %v778
      %v780 = vand.u32 %v748, 4294901760
      %v781 = vsub.f32 %v748, %v780
      %v782 = vand.u32 %v781, 4294901760
      %v783 = vsub.f32 %v781, %v782
      %v784 = vand.u32 %v783, 4294901760
      %785 = vmatmul.f32.gmra.mxu0 %v784
      %v786 = vpop.f32.mrf.mxu0
      %v787 = vadd.f32 0.0, %v786
      %v788 = vand.u32 %v750, 4294901760
      %v789 = vsub.f32 %v750, %v788
      %v790 = vand.u32 %v789, 4294901760
      %v791 = vsub.f32 %v789, %v790
      %v792 = vand.u32 %v791, 4294901760
      %793 = vmatmul.f32.gmra.mxu0 %v792
      %v794 = vpop.f32.mrf.mxu0
      %v795 = vadd.f32 0.0, %v794
      %v796 = vand.u32 %v752, 4294901760
      %v797 = vsub.f32 %v752, %v796
      %v798 = vand.u32 %v797, 4294901760
      %v799 = vsub.f32 %v797, %v798
      %v800 = vand.u32 %v799, 4294901760
      %801 = vmatmul.f32.gmra.mxu0 %v800
      %v802 = vpop.f32.mrf.mxu0
      %v803 = vadd.f32 0.0, %v802
      %804 = vdwg.mxu0
      %805 = vmatpush.msra.mxu0 0.0
      %806 = vmatpush.msra.mxu0 0.0
      %807 = vmatpush.msra.mxu0 0.0
      %808 = vmatpush.msra.mxu0 0.0
      %809 = vmatpush.msra.mxu0 0.0
      %810 = vmatpush.msra.mxu0 0.0
      %811 = vmatpush.msra.mxu0 0.0
      %812 = vmatpush.msra.mxu0 0.0
      %813 = vmatpush.msra.mxu0 0.0
      %814 = vmatpush.msra.mxu0 0.0
      %815 = vmatpush.msra.mxu0 0.0
      %816 = vmatpush.msra.mxu0 0.0
      %817 = vmatpush.msra.mxu0 0.0
      %818 = vmatpush.msra.mxu0 0.0
      %v819 = vand.u32 %v174, 4294901760
      %v820 = vsub.f32 %v174, %v819
      %v821 = vand.u32 %v820, 4294901760
      %v822 = vsub.f32 %v820, %v821
      %v823 = vand.u32 %v822, 4294901760
      %824 = vmatpush.msra.mxu0 %v823
      %v825 = vand.u32 %v173, 4294901760
      %v826 = vsub.f32 %v173, %v825
      %v827 = vand.u32 %v826, 4294901760
      %v828 = vsub.f32 %v826, %v827
      %v829 = vand.u32 %v828, 4294901760
      %830 = vmatpush.msra.mxu0 %v829
      %v831 = vand.u32 %v746, 4294901760
      %832 = vmatmul.f32.gmra.mxu0 %v831
      %v833 = vpop.f32.mrf.mxu0
      %v834 = vadd.f32 %v779, %v833
      %v835 = vand.u32 %v748, 4294901760
      %836 = vmatmul.f32.gmra.mxu0 %v835
      %v837 = vpop.f32.mrf.mxu0
      %v838 = vadd.f32 %v787, %v837
      %v839 = vand.u32 %v750, 4294901760
      %840 = vmatmul.f32.gmra.mxu0 %v839
      %v841 = vpop.f32.mrf.mxu0
      %v842 = vadd.f32 %v795, %v841
      %v843 = vand.u32 %v752, 4294901760
      %844 = vmatmul.f32.gmra.mxu0 %v843
      %v845 = vpop.f32.mrf.mxu0
      %v846 = vadd.f32 %v803, %v845
      %847 = vdwg.mxu0
      %848 = vmatpush.msra.mxu0 0.0
      %849 = vmatpush.msra.mxu0 0.0
      %850 = vmatpush.msra.mxu0 0.0
      %851 = vmatpush.msra.mxu0 0.0
      %852 = vmatpush.msra.mxu0 0.0
      %853 = vmatpush.msra.mxu0 0.0
      %854 = vmatpush.msra.mxu0 0.0
      %855 = vmatpush.msra.mxu0 0.0
      %856 = vmatpush.msra.mxu0 0.0
      %857 = vmatpush.msra.mxu0 0.0
      %858 = vmatpush.msra.mxu0 0.0
      %859 = vmatpush.msra.mxu0 0.0
      %860 = vmatpush.msra.mxu0 0.0
      %861 = vmatpush.msra.mxu0 0.0
      %v862 = vand.u32 %v174, 4294901760
      %v863 = vsub.f32 %v174, %v862
      %864 = vmatpush.msra.mxu0 %v863
      %v865 = vand.u32 %v173, 4294901760
      %v866 = vsub.f32 %v173, %v865
      %867 = vmatpush.msra.mxu0 %v866
      %v868 = vand.u32 %v746, 4294901760
      %v869 = vsub.f32 %v746, %v868
      %870 = vmatmul.f32.gmra.mxu0 %v869
      %v871 = vpop.f32.mrf.mxu0
      %v872 = vadd.f32 %v834, %v871
      %v873 = vand.u32 %v748, 4294901760
      %v874 = vsub.f32 %v748, %v873
      %875 = vmatmul.f32.gmra.mxu0 %v874
      %v876 = vpop.f32.mrf.mxu0
      %v877 = vadd.f32 %v838, %v876
      %v878 = vand.u32 %v750, 4294901760
      %v879 = vsub.f32 %v750, %v878
      %880 = vmatmul.f32.gmra.mxu0 %v879
      %v881 = vpop.f32.mrf.mxu0
      %v882 = vadd.f32 %v842, %v881
      %v883 = vand.u32 %v752, 4294901760
      %v884 = vsub.f32 %v752, %v883
      %885 = vmatmul.f32.gmra.mxu0 %v884
      %v886 = vpop.f32.mrf.mxu0
      %v887 = vadd.f32 %v846, %v886
      %888 = vdwg.mxu0
      %889 = vmatpush.msra.mxu0 0.0
      %890 = vmatpush.msra.mxu0 0.0
      %891 = vmatpush.msra.mxu0 0.0
      %892 = vmatpush.msra.mxu0 0.0
      %893 = vmatpush.msra.mxu0 0.0
      %894 = vmatpush.msra.mxu0 0.0
      %895 = vmatpush.msra.mxu0 0.0
      %896 = vmatpush.msra.mxu0 0.0
      %897 = vmatpush.msra.mxu0 0.0
      %898 = vmatpush.msra.mxu0 0.0
      %899 = vmatpush.msra.mxu0 0.0
      %900 = vmatpush.msra.mxu0 0.0
      %901 = vmatpush.msra.mxu0 0.0
      %902 = vmatpush.msra.mxu0 0.0
      %v903 = vand.u32 %v174, 4294901760
      %904 = vmatpush.msra.mxu0 %v903
      %v905 = vand.u32 %v173, 4294901760
      %906 = vmatpush.msra.mxu0 %v905
      %v907 = vand.u32 %v746, 4294901760
      %v908 = vsub.f32 %v746, %v907
      %v909 = vand.u32 %v908, 4294901760
      %910 = vmatmul.f32.gmra.mxu0 %v909
      %v911 = vpop.f32.mrf.mxu0
      %v912 = vadd.f32 %v872, %v911
      %v913 = vand.u32 %v748, 4294901760
      %v914 = vsub.f32 %v748, %v913
      %v915 = vand.u32 %v914, 4294901760
      %916 = vmatmul.f32.gmra.mxu0 %v915
      %v917 = vpop.f32.mrf.mxu0
      %v918 = vadd.f32 %v877, %v917
      %v919 = vand.u32 %v750, 4294901760
      %v920 = vsub.f32 %v750, %v919
      %v921 = vand.u32 %v920, 4294901760
      %922 = vmatmul.f32.gmra.mxu0 %v921
      %v923 = vpop.f32.mrf.mxu0
      %v924 = vadd.f32 %v882, %v923
      %v925 = vand.u32 %v752, 4294901760
      %v926 = vsub.f32 %v752, %v925
      %v927 = vand.u32 %v926, 4294901760
      %928 = vmatmul.f32.gmra.mxu0 %v927
      %v929 = vpop.f32.mrf.mxu0
      %v930 = vadd.f32 %v887, %v929
      %931 = vdwg.mxu0
      %932 = vmatpush.msra.mxu0 0.0
      %933 = vmatpush.msra.mxu0 0.0
      %934 = vmatpush.msra.mxu0 0.0
      %935 = vmatpush.msra.mxu0 0.0
      %936 = vmatpush.msra.mxu0 0.0
      %937 = vmatpush.msra.mxu0 0.0
      %938 = vmatpush.msra.mxu0 0.0
      %939 = vmatpush.msra.mxu0 0.0
      %940 = vmatpush.msra.mxu0 0.0
      %941 = vmatpush.msra.mxu0 0.0
      %942 = vmatpush.msra.mxu0 0.0
      %943 = vmatpush.msra.mxu0 0.0
      %944 = vmatpush.msra.mxu0 0.0
      %945 = vmatpush.msra.mxu0 0.0
      %v946 = vand.u32 %v174, 4294901760
      %v947 = vsub.f32 %v174, %v946
      %v948 = vand.u32 %v947, 4294901760
      %949 = vmatpush.msra.mxu0 %v948
      %v950 = vand.u32 %v173, 4294901760
      %v951 = vsub.f32 %v173, %v950
      %v952 = vand.u32 %v951, 4294901760
      %953 = vmatpush.msra.mxu0 %v952
      %v954 = vand.u32 %v746, 4294901760
      %955 = vmatmul.f32.gmra.mxu0 %v954
      %v956 = vpop.f32.mrf.mxu0
      %v957 = vadd.f32 %v912, %v956
      %v958 = vand.u32 %v748, 4294901760
      %959 = vmatmul.f32.gmra.mxu0 %v958
      %v960 = vpop.f32.mrf.mxu0
      %v961 = vadd.f32 %v918, %v960
      %v962 = vand.u32 %v750, 4294901760
      %963 = vmatmul.f32.gmra.mxu0 %v962
      %v964 = vpop.f32.mrf.mxu0
      %v965 = vadd.f32 %v924, %v964
      %v966 = vand.u32 %v752, 4294901760
      %967 = vmatmul.f32.gmra.mxu0 %v966
      %v968 = vpop.f32.mrf.mxu0
      %v969 = vadd.f32 %v930, %v968
      %970 = vdwg.mxu0
      %971 = vmatpush.msra.mxu0 0.0
      %972 = vmatpush.msra.mxu0 0.0
      %973 = vmatpush.msra.mxu0 0.0
      %974 = vmatpush.msra.mxu0 0.0
      %975 = vmatpush.msra.mxu0 0.0
      %976 = vmatpush.msra.mxu0 0.0
      %977 = vmatpush.msra.mxu0 0.0
      %978 = vmatpush.msra.mxu0 0.0
      %979 = vmatpush.msra.mxu0 0.0
      %980 = vmatpush.msra.mxu0 0.0
      %981 = vmatpush.msra.mxu0 0.0
      %982 = vmatpush.msra.mxu0 0.0
      %983 = vmatpush.msra.mxu0 0.0
      %984 = vmatpush.msra.mxu0 0.0
      %v985 = vand.u32 %v174, 4294901760
      %986 = vmatpush.msra.mxu0 %v985
      %v987 = vand.u32 %v173, 4294901760
      %988 = vmatpush.msra.mxu0 %v987
      %v989 = vand.u32 %v746, 4294901760
      %990 = vmatmul.f32.gmra.mxu0 %v989
      %v991 = vpop.f32.mrf.mxu0
      %v992 = vadd.f32 %v957, %v991
      %v993 = vand.u32 %v748, 4294901760
      %994 = vmatmul.f32.gmra.mxu0 %v993
      %v995 = vpop.f32.mrf.mxu0
      %v996 = vadd.f32 %v961, %v995
      %v997 = vand.u32 %v750, 4294901760
      %998 = vmatmul.f32.gmra.mxu0 %v997
      %v999 = vpop.f32.mrf.mxu0
      %v1000 = vadd.f32 %v965, %v999
      %v1001 = vand.u32 %v752, 4294901760
      %1002 = vmatmul.f32.gmra.mxu0 %v1001
      %v1003 = vpop.f32.mrf.mxu0
      %v1004 = vadd.f32 %v969, %v1003
      %1005 = vdwg.mxu0
      %1006 = vmatpush.msra.mxu0 0.0
      %1007 = vmatpush.msra.mxu0 0.0
      %1008 = vmatpush.msra.mxu0 0.0
      %1009 = vmatpush.msra.mxu0 0.0
      %1010 = vmatpush.msra.mxu0 0.0
      %1011 = vmatpush.msra.mxu0 0.0
      %1012 = vmatpush.msra.mxu0 0.0
      %1013 = vmatpush.msra.mxu0 0.0
      %1014 = vmatpush.msra.mxu0 0.0
      %1015 = vmatpush.msra.mxu0 0.0
      %1016 = vmatpush.msra.mxu0 0.0
      %1017 = vmatpush.msra.mxu0 0.0
      %1018 = vmatpush.msra.mxu0 0.0
      %1019 = vmatpush.msra.mxu0 0.0
      %v1020 = vand.u32 %v176, 4294901760
      %1021 = vmatpush.msra.mxu0 %v1020
      %v1022 = vand.u32 %v175, 4294901760
      %1023 = vmatpush.msra.mxu0 %v1022
      %v1024 = vand.u32 %v746, 4294901760
      %v1025 = vsub.f32 %v746, %v1024
      %v1026 = vand.u32 %v1025, 4294901760
      %v1027 = vsub.f32 %v1025, %v1026
      %v1028 = vand.u32 %v1027, 4294901760
      %1029 = vmatmul.f32.gmra.mxu0 %v1028
      %v1030 = vpop.f32.mrf.mxu0
      %v1031 = vadd.f32 0.0, %v1030
      %v1032 = vand.u32 %v748, 4294901760
      %v1033 = vsub.f32 %v748, %v1032
      %v1034 = vand.u32 %v1033, 4294901760
      %v1035 = vsub.f32 %v1033, %v1034
      %v1036 = vand.u32 %v1035, 4294901760
      %1037 = vmatmul.f32.gmra.mxu0 %v1036
      %v1038 = vpop.f32.mrf.mxu0
      %v1039 = vadd.f32 0.0, %v1038
      %v1040 = vand.u32 %v750, 4294901760
      %v1041 = vsub.f32 %v750, %v1040
      %v1042 = vand.u32 %v1041, 4294901760
      %v1043 = vsub.f32 %v1041, %v1042
      %v1044 = vand.u32 %v1043, 4294901760
      %1045 = vmatmul.f32.gmra.mxu0 %v1044
      %v1046 = vpop.f32.mrf.mxu0
      %v1047 = vadd.f32 0.0, %v1046
      %v1048 = vand.u32 %v752, 4294901760
      %v1049 = vsub.f32 %v752, %v1048
      %v1050 = vand.u32 %v1049, 4294901760
      %v1051 = vsub.f32 %v1049, %v1050
      %v1052 = vand.u32 %v1051, 4294901760
      %1053 = vmatmul.f32.gmra.mxu0 %v1052
      %v1054 = vpop.f32.mrf.mxu0
      %v1055 = vadd.f32 0.0, %v1054
      %1056 = vdwg.mxu0
      %1057 = vmatpush.msra.mxu0 0.0
      %1058 = vmatpush.msra.mxu0 0.0
      %1059 = vmatpush.msra.mxu0 0.0
      %1060 = vmatpush.msra.mxu0 0.0
      %1061 = vmatpush.msra.mxu0 0.0
      %1062 = vmatpush.msra.mxu0 0.0
      %1063 = vmatpush.msra.mxu0 0.0
      %1064 = vmatpush.msra.mxu0 0.0
      %1065 = vmatpush.msra.mxu0 0.0
      %1066 = vmatpush.msra.mxu0 0.0
      %1067 = vmatpush.msra.mxu0 0.0
      %1068 = vmatpush.msra.mxu0 0.0
      %1069 = vmatpush.msra.mxu0 0.0
      %1070 = vmatpush.msra.mxu0 0.0
      %v1071 = vand.u32 %v176, 4294901760
      %v1072 = vsub.f32 %v176, %v1071
      %v1073 = vand.u32 %v1072, 4294901760
      %v1074 = vsub.f32 %v1072, %v1073
      %v1075 = vand.u32 %v1074, 4294901760
      %1076 = vmatpush.msra.mxu0 %v1075
      %v1077 = vand.u32 %v175, 4294901760
      %v1078 = vsub.f32 %v175, %v1077
      %v1079 = vand.u32 %v1078, 4294901760
      %v1080 = vsub.f32 %v1078, %v1079
      %v1081 = vand.u32 %v1080, 4294901760
      %1082 = vmatpush.msra.mxu0 %v1081
      %v1083 = vand.u32 %v746, 4294901760
      %1084 = vmatmul.f32.gmra.mxu0 %v1083
      %v1085 = vpop.f32.mrf.mxu0
      %v1086 = vadd.f32 %v1031, %v1085
      %v1087 = vand.u32 %v748, 4294901760
      %1088 = vmatmul.f32.gmra.mxu0 %v1087
      %v1089 = vpop.f32.mrf.mxu0
      %v1090 = vadd.f32 %v1039, %v1089
      %v1091 = vand.u32 %v750, 4294901760
      %1092 = vmatmul.f32.gmra.mxu0 %v1091
      %v1093 = vpop.f32.mrf.mxu0
      %v1094 = vadd.f32 %v1047, %v1093
      %v1095 = vand.u32 %v752, 4294901760
      %1096 = vmatmul.f32.gmra.mxu0 %v1095
      %v1097 = vpop.f32.mrf.mxu0
      %v1098 = vadd.f32 %v1055, %v1097
      %1099 = vdwg.mxu0
      %1100 = vmatpush.msra.mxu0 0.0
      %1101 = vmatpush.msra.mxu0 0.0
      %1102 = vmatpush.msra.mxu0 0.0
      %1103 = vmatpush.msra.mxu0 0.0
      %1104 = vmatpush.msra.mxu0 0.0
      %1105 = vmatpush.msra.mxu0 0.0
      %1106 = vmatpush.msra.mxu0 0.0
      %1107 = vmatpush.msra.mxu0 0.0
      %1108 = vmatpush.msra.mxu0 0.0
      %1109 = vmatpush.msra.mxu0 0.0
      %1110 = vmatpush.msra.mxu0 0.0
      %1111 = vmatpush.msra.mxu0 0.0
      %1112 = vmatpush.msra.mxu0 0.0
      %1113 = vmatpush.msra.mxu0 0.0
      %v1114 = vand.u32 %v176, 4294901760
      %v1115 = vsub.f32 %v176, %v1114
      %1116 = vmatpush.msra.mxu0 %v1115
      %v1117 = vand.u32 %v175, 4294901760
      %v1118 = vsub.f32 %v175, %v1117
      %1119 = vmatpush.msra.mxu0 %v1118
      %v1120 = vand.u32 %v746, 4294901760
      %v1121 = vsub.f32 %v746, %v1120
      %1122 = vmatmul.f32.gmra.mxu0 %v1121
      %v1123 = vpop.f32.mrf.mxu0
      %v1124 = vadd.f32 %v1086, %v1123
      %v1125 = vand.u32 %v748, 4294901760
      %v1126 = vsub.f32 %v748, %v1125
      %1127 = vmatmul.f32.gmra.mxu0 %v1126
      %v1128 = vpop.f32.mrf.mxu0
      %v1129 = vadd.f32 %v1090, %v1128
      %v1130 = vand.u32 %v750, 4294901760
      %v1131 = vsub.f32 %v750, %v1130
      %1132 = vmatmul.f32.gmra.mxu0 %v1131
      %v1133 = vpop.f32.mrf.mxu0
      %v1134 = vadd.f32 %v1094, %v1133
      %v1135 = vand.u32 %v752, 4294901760
      %v1136 = vsub.f32 %v752, %v1135
      %1137 = vmatmul.f32.gmra.mxu0 %v1136
      %v1138 = vpop.f32.mrf.mxu0
      %v1139 = vadd.f32 %v1098, %v1138
      %1140 = vdwg.mxu0
      %1141 = vmatpush.msra.mxu0 0.0
      %1142 = vmatpush.msra.mxu0 0.0
      %1143 = vmatpush.msra.mxu0 0.0
      %1144 = vmatpush.msra.mxu0 0.0
      %1145 = vmatpush.msra.mxu0 0.0
      %1146 = vmatpush.msra.mxu0 0.0
      %1147 = vmatpush.msra.mxu0 0.0
      %1148 = vmatpush.msra.mxu0 0.0
      %1149 = vmatpush.msra.mxu0 0.0
      %1150 = vmatpush.msra.mxu0 0.0
      %1151 = vmatpush.msra.mxu0 0.0
      %1152 = vmatpush.msra.mxu0 0.0
      %1153 = vmatpush.msra.mxu0 0.0
      %1154 = vmatpush.msra.mxu0 0.0
      %v1155 = vand.u32 %v176, 4294901760
      %1156 = vmatpush.msra.mxu0 %v1155
      %v1157 = vand.u32 %v175, 4294901760
      %1158 = vmatpush.msra.mxu0 %v1157
      %v1159 = vand.u32 %v746, 4294901760
      %v1160 = vsub.f32 %v746, %v1159
      %v1161 = vand.u32 %v1160, 4294901760
      %1162 = vmatmul.f32.gmra.mxu0 %v1161
      %v1163 = vpop.f32.mrf.mxu0
      %v1164 = vadd.f32 %v1124, %v1163
      %v1165 = vand.u32 %v748, 4294901760
      %v1166 = vsub.f32 %v748, %v1165
      %v1167 = vand.u32 %v1166, 4294901760
      %1168 = vmatmul.f32.gmra.mxu0 %v1167
      %v1169 = vpop.f32.mrf.mxu0
      %v1170 = vadd.f32 %v1129, %v1169
      %v1171 = vand.u32 %v750, 4294901760
      %v1172 = vsub.f32 %v750, %v1171
      %v1173 = vand.u32 %v1172, 4294901760
      %1174 = vmatmul.f32.gmra.mxu0 %v1173
      %v1175 = vpop.f32.mrf.mxu0
      %v1176 = vadd.f32 %v1134, %v1175
      %v1177 = vand.u32 %v752, 4294901760
      %v1178 = vsub.f32 %v752, %v1177
      %v1179 = vand.u32 %v1178, 4294901760
      %1180 = vmatmul.f32.gmra.mxu0 %v1179
      %v1181 = vpop.f32.mrf.mxu0
      %v1182 = vadd.f32 %v1139, %v1181
      %1183 = vdwg.mxu0
      %1184 = vmatpush.msra.mxu0 0.0
      %1185 = vmatpush.msra.mxu0 0.0
      %1186 = vmatpush.msra.mxu0 0.0
      %1187 = vmatpush.msra.mxu0 0.0
      %1188 = vmatpush.msra.mxu0 0.0
      %1189 = vmatpush.msra.mxu0 0.0
      %1190 = vmatpush.msra.mxu0 0.0
      %1191 = vmatpush.msra.mxu0 0.0
      %1192 = vmatpush.msra.mxu0 0.0
      %1193 = vmatpush.msra.mxu0 0.0
      %1194 = vmatpush.msra.mxu0 0.0
      %1195 = vmatpush.msra.mxu0 0.0
      %1196 = vmatpush.msra.mxu0 0.0
      %1197 = vmatpush.msra.mxu0 0.0
      %v1198 = vand.u32 %v176, 4294901760
      %v1199 = vsub.f32 %v176, %v1198
      %v1200 = vand.u32 %v1199, 4294901760
      %1201 = vmatpush.msra.mxu0 %v1200
      %v1202 = vand.u32 %v175, 4294901760
      %v1203 = vsub.f32 %v175, %v1202
      %v1204 = vand.u32 %v1203, 4294901760
      %1205 = vmatpush.msra.mxu0 %v1204
      %v1206 = vand.u32 %v746, 4294901760
      %1207 = vmatmul.f32.gmra.mxu0 %v1206
      %v1208 = vpop.f32.mrf.mxu0
      %v1209 = vadd.f32 %v1164, %v1208
      %v1210 = vand.u32 %v748, 4294901760
      %1211 = vmatmul.f32.gmra.mxu0 %v1210
      %v1212 = vpop.f32.mrf.mxu0
      %v1213 = vadd.f32 %v1170, %v1212
      %v1214 = vand.u32 %v750, 4294901760
      %1215 = vmatmul.f32.gmra.mxu0 %v1214
      %v1216 = vpop.f32.mrf.mxu0
      %v1217 = vadd.f32 %v1176, %v1216
      %v1218 = vand.u32 %v752, 4294901760
      %1219 = vmatmul.f32.gmra.mxu0 %v1218
      %v1220 = vpop.f32.mrf.mxu0
      %v1221 = vadd.f32 %v1182, %v1220
      %1222 = vdwg.mxu0
      %1223 = vmatpush.msra.mxu0 0.0
      %1224 = vmatpush.msra.mxu0 0.0
      %1225 = vmatpush.msra.mxu0 0.0
      %1226 = vmatpush.msra.mxu0 0.0
      %1227 = vmatpush.msra.mxu0 0.0
      %1228 = vmatpush.msra.mxu0 0.0
      %1229 = vmatpush.msra.mxu0 0.0
      %1230 = vmatpush.msra.mxu0 0.0
      %1231 = vmatpush.msra.mxu0 0.0
      %1232 = vmatpush.msra.mxu0 0.0
      %1233 = vmatpush.msra.mxu0 0.0
      %1234 = vmatpush.msra.mxu0 0.0
      %1235 = vmatpush.msra.mxu0 0.0
      %1236 = vmatpush.msra.mxu0 0.0
      %v1237 = vand.u32 %v176, 4294901760
      %1238 = vmatpush.msra.mxu0 %v1237
      %v1239 = vand.u32 %v175, 4294901760
      %1240 = vmatpush.msra.mxu0 %v1239
      %v1241 = vand.u32 %v746, 4294901760
      %1242 = vmatmul.f32.gmra.mxu0 %v1241
      %v1243 = vpop.f32.mrf.mxu0
      %v1244 = vadd.f32 %v1209, %v1243
      %v1245 = vand.u32 %v748, 4294901760
      %1246 = vmatmul.f32.gmra.mxu0 %v1245
      %v1247 = vpop.f32.mrf.mxu0
      %v1248 = vadd.f32 %v1213, %v1247
      %v1249 = vand.u32 %v750, 4294901760
      %1250 = vmatmul.f32.gmra.mxu0 %v1249
      %v1251 = vpop.f32.mrf.mxu0
      %v1252 = vadd.f32 %v1217, %v1251
      %v1253 = vand.u32 %v752, 4294901760
      %1254 = vmatmul.f32.gmra.mxu0 %v1253
      %v1255 = vpop.f32.mrf.mxu0
      %v1256 = vadd.f32 %v1221, %v1255
      %1257 = vdwg.mxu0
      %vm1258 = vcmask 64512
      %1259 = vst.msk [vmem:[%s172] sm:$0xff] %vm1258, %v468
      %1260 = vst.msk [vmem:[%s172 + $0x8] sm:$0xff] %vm1258, %v472
      %1261 = vst.msk [vmem:[%s172 + $0x10] sm:$0xff] %vm1258, %v476
      %1262 = vst.msk [vmem:[%s172 + $0x18] sm:$0xff] %vm1258, %v480
      %s1263 = scalar_lea.vmem %s172, 32
      %1264 = vst.msk [vmem:[%s1263] sm:$0xff] %vm1258, %v720
      %1265 = vst.msk [vmem:[%s1263 + $0x8] sm:$0xff] %vm1258, %v724
      %1266 = vst.msk [vmem:[%s1263 + $0x10] sm:$0xff] %vm1258, %v728
      %1267 = vst.msk [vmem:[%s1263 + $0x18] sm:$0xff] %vm1258, %v732
      %s1268 = scalar_lea.vmem %s172, 64
      %1269 = vst.msk [vmem:[%s1268] sm:$0xff] %vm1258, %v992
      %1270 = vst.msk [vmem:[%s1268 + $0x8] sm:$0xff] %vm1258, %v996
      %1271 = vst.msk [vmem:[%s1268 + $0x10] sm:$0xff] %vm1258, %v1000
      %1272 = vst.msk [vmem:[%s1268 + $0x18] sm:$0xff] %vm1258, %v1004
      %s1273 = scalar_lea.vmem %s172, 96
      %1274 = vst.msk [vmem:[%s1273] sm:$0xff] %vm1258, %v1244
      %1275 = vst.msk [vmem:[%s1273 + $0x8] sm:$0xff] %vm1258, %v1248
      %1276 = vst.msk [vmem:[%s1273 + $0x10] sm:$0xff] %vm1258, %v1252
      %1277 = vst.msk [vmem:[%s1273 + $0x18] sm:$0xff] %vm1258, %v1256
      %p1278 = scmp.lt.s32.totalorder %s14, 1
      %s1279 = scalar_select %p1278, %s14, 1
      %s1280 = smul.addr %s1279, 16
      %s1281 = smul.addr %s1280, 8
      %s1282 = scalar_lea.vmem %s3, %s1281
      // Predicated region
      $region33: #{_dwt_impl.1} parent=31 // pred_check
        %p1283 = pneg %p100
      $region34: #{_dwt_impl.1} parent=31 // pred_check_branch
        %1285 = sbr.rel (%p1283) target = $region36
      $region35: #{_dwt_impl.1} parent=31 // pred_region
        _
      $region36: #{_dwt_impl.1} parent=31 // pred_fallthru
        _
    $region32: #{_dwt_impl.1} parent=5 // pred_fallthru
      _
    %p1286 = scmp.le.s32.totalorder 2, %s9
    // Predicated region
    $region37: #{_dwt_impl.1} parent=5 // pred_check
      %p1287 = pneg %p1286
    $region38: #{_dwt_impl.1} parent=5 // pred_check_branch
      %1289 = sbr.rel (%p1287) target = $region40
    $region39: #{_dwt_impl.1} parent=5 // pred_region
      %s1290 = ssub.s32 %s9, 2
      // Predicated region
      $region41: #{_dwt_impl.1} parent=39 // pred_check
        %p1291 = pneg %p106
      $region42: #{_dwt_impl.1} parent=39 // pred_check_branch
        %1293 = sbr.rel (%p1291) target = $region44
      $region43: #{_dwt_impl.1} parent=39 // pred_region
        %p1294 = scmp.lt.s32.totalorder %s15, 1
        %s1295 = scalar_select %p1294, %s15, 1
        %s1296 = smul.addr %s1295, 16
        %s1297 = smul.addr %s1296, 8
        %s1298 = scalar_lea.vmem %s3, %s1297
      $region44: #{_dwt_impl.1} parent=39 // pred_fallthru
        _
    $region40: #{_dwt_impl.1} parent=5 // pred_fallthru
      _
  $region6: #{_dwt_impl.1} parent=0 // loop_footer
    %s13 = sadd.s32 1, %s9
  $region7: #{_dwt_impl.1} parent=0 // loop_footer_branch
    %8 = sbr.rel target = $region3
  $region8: #{_dwt_impl.1} parent=0 // loop_exit
    _

// kernel: _dwt_impl.1
$region0: #{_dwt_impl.1}
  #allocation0 [shape = 'u32[]', space=smem, size = 0x4, offset = 0x4, fixed_abs, tag = 'smem constant byte address 0x4 - core index']
  #allocation1 [shape = 'u32[72,128]{1,0:T(1,128)}', space=vmem, size = 0x9000, scoped, tag = 'internal scratch']
  %s0 = inlined_call_operand.vmem [shape: f32[64,32], index: 0, kind: input, shape index: {}]
  %s1 = inlined_call_operand.vmem [shape: f32[16,8], index: 1, kind: input, shape index: {}]
  %s2 = inlined_call_operand.vmem [shape: f32[16,8], index: 2, kind: input, shape index: {}]
  %s3 = inlined_call_operand.vmem [shape: f32[2,4,32,8], index: 3, kind: output, shape index: {}]
  %s4 = sld [smem:[#allocation0]]
  $region45: #{_dwt_impl.1} parent=0
    _
  %s6 = ssub.s32 1, %s4
  %s7 = scalar_select 0, %s6, %s4
  loop: start=0, step=1, limit=4
  $region2: #{_dwt_impl.1} parent=0 // loop_pre_header
    _
  $region3: #{_dwt_impl.1} parent=0 // loop_header
    %s9 = sphi 0, %s13
    %p10 = scmp.ge.s32.totalorder %s9, 4
    %s19 = sphi 0, %s21
    %s22 = sphi 0, %s19
    %s23 = sphi 0, %s22
    %s39 = sphi 0, %s23
    %s43 = sphi 0, %s43
    %s45 = sphi 0, %s43
    %s46 = sphi 0, %s45
    %s60 = sphi 0, %s46
    %s64 = sphi 0, %s64
    %s66 = sphi 0, %s64
    %s67 = sphi 0, %s66
    %s81 = sphi 0, %s67
    %s87 = sphi 0, %s89
    %s90 = sphi 0, %s87
    %s91 = sphi 0, %s90
    %s107 = sphi 0, %s91
  $region4: #{_dwt_impl.1} parent=0 // loop_header_branch
    %12 = sbr.rel (%p10) target = $region8
  $region5: #{_dwt_impl.1} parent=0 // loop_body
    %s14 = ssub.s32 %s9, 1
    %s15 = ssub.s32 %s9, 2
    %s16 = sadd.s32 %s9, 1
    %s17 = ssub.s32 %s9, %s16
    %p18 = scmp.eq.s32.totalorder %s17, 0
    %s20 = sadd.s32 %s19, 1
    %s21 = scalar_select %p18, %s19, %s20
    %p24 = pneg %p18
    %p25 = scmp.eq.s32.totalorder %s9, 1
    %p26 = por %p24, %p25
    %p27 = scmp.ne.s32.totalorder %s19, %s22
    %p28 = scmp.eq.s32.totalorder %s9, 0
    %p29 = por %p27, %p28
    %p30 = scmp.ne.s32.totalorder %s19, %s22
    %p31 = scmp.eq.s32.totalorder %s14, 1
    %p32 = por %p30, %p31
    %p33 = scmp.ne.s32.totalorder %s22, %s23
    %p34 = scmp.eq.s32.totalorder %s14, 0
    %p35 = por %p33, %p34
    %p36 = scmp.ne.s32.totalorder %s22, %s23
    %p37 = scmp.eq.s32.totalorder %s15, 1
    %p38 = por %p36, %p37
    %p40 = scmp.ne.s32.totalorder %s23, %s39
    %p41 = scmp.eq.s32.totalorder %s15, 0
    %p42 = por %p40, %p41
    %s44 = sadd.s32 %s43, 1
    %p47 = scmp.eq.s32.totalorder %s9, 1
    %p48 = scmp.ne.s32.totalorder %s43, %s45
    %p49 = scmp.eq.s32.totalorder %s9, 0
    %p50 = por %p48, %p49
    %p51 = scmp.ne.s32.totalorder %s43, %s45
    %p52 = scmp.eq.s32.totalorder %s14, 1
    %p53 = por %p51, %p52
    %p54 = scmp.ne.s32.totalorder %s45, %s46
    %p55 = scmp.eq.s32.totalorder %s14, 0
    %p56 = por %p54, %p55
    %p57 = scmp.ne.s32.totalorder %s45, %s46
    %p58 = scmp.eq.s32.totalorder %s15, 1
    %p59 = por %p57, %p58
    %p61 = scmp.ne.s32.totalorder %s46, %s60
    %p62 = scmp.eq.s32.totalorder %s15, 0
    %p63 = por %p61, %p62
    %s65 = sadd.s32 %s64, 1
    %p68 = scmp.eq.s32.totalorder %s9, 1
    %p69 = scmp.ne.s32.totalorder %s64, %s66
    %p70 = scmp.eq.s32.totalorder %s9, 0
    %p71 = por %p69, %p70
    %p72 = scmp.ne.s32.totalorder %s64, %s66
    %p73 = scmp.eq.s32.totalorder %s14, 1
    %p74 = por %p72, %p73
    %p75 = scmp.ne.s32.totalorder %s66, %s67
    %p76 = scmp.eq.s32.totalorder %s14, 0
    %p77 = por %p75, %p76
    %p78 = scmp.ne.s32.totalorder %s66, %s67
    %p79 = scmp.eq.s32.totalorder %s15, 1
    %p80 = por %p78, %p79
    %p82 = scmp.ne.s32.totalorder %s67, %s81
    %p83 = scmp.eq.s32.totalorder %s15, 0
    %p84 = por %p82, %p83
    %s85 = ssub.s32 %s9, %s16
    %p86 = scmp.eq.s32.totalorder %s85, 0
    %s88 = sadd.s32 %s87, 1
    %s89 = scalar_select %p86, %s87, %s88
    %p92 = pneg %p86
    %p93 = scmp.eq.s32.totalorder %s9, 1
    %p94 = por %p92, %p93
    %p95 = scmp.ne.s32.totalorder %s87, %s90
    %p96 = scmp.eq.s32.totalorder %s9, 0
    %p97 = por %p95, %p96
    %p98 = scmp.ne.s32.totalorder %s87, %s90
    %p99 = scmp.eq.s32.totalorder %s14, 1
    %p100 = por %p98, %p99
    %p101 = scmp.ne.s32.totalorder %s90, %s91
    %p102 = scmp.eq.s32.totalorder %s14, 0
    %p103 = por %p101, %p102
    %p104 = scmp.ne.s32.totalorder %s90, %s91
    %p105 = scmp.eq.s32.totalorder %s15, 1
    %p106 = por %p104, %p105
    %p108 = scmp.ne.s32.totalorder %s91, %s107
    %p109 = scmp.eq.s32.totalorder %s15, 0
    %p110 = por %p108, %p109
    %p111 = scmp.le.s32.totalorder 1, %s9
    %p112 = scmp.lt.s32.totalorder %s9, 3
    %p113 = pnand %p111, %p112
    %p114 = pneg %p113
    // Predicated region
    $region9: #{_dwt_impl.1} parent=5 // pred_check
      _
    $region10: #{_dwt_impl.1} parent=5 // pred_check_branch
      %116 = sbr.rel (%p113) target = $region12
    $region11: #{_dwt_impl.1} parent=5 // pred_region
      %s117 = ssub.s32 %s9, 1
      // Predicated region
      $region13: #{_dwt_impl.1} parent=11 // pred_check
        %p118 = pneg %p56
      $region14: #{_dwt_impl.1} parent=11 // pred_check_branch
        %120 = sbr.rel (%p118) target = $region16
      $region15: #{_dwt_impl.1} parent=11 // pred_region
        _
      $region16: #{_dwt_impl.1} parent=11 // pred_fallthru
        _
      // Predicated region
      $region17: #{_dwt_impl.1} parent=11 // pred_check
        %p121 = pneg %p77
      $region18: #{_dwt_impl.1} parent=11 // pred_check_branch
        %123 = sbr.rel (%p121) target = $region20
      $region19: #{_dwt_impl.1} parent=11 // pred_region
        _
      $region20: #{_dwt_impl.1} parent=11 // pred_fallthru
        _
    $region12: #{_dwt_impl.1} parent=5 // pred_fallthru
      _
    %p124 = scmp.lt.s32.totalorder %s9, 2
    // Predicated region
    $region21: #{_dwt_impl.1} parent=5 // pred_check
      %p125 = pneg %p124
    $region22: #{_dwt_impl.1} parent=5 // pred_check_branch
      %127 = sbr.rel (%p125) target = $region24
    $region23: #{_dwt_impl.1} parent=5 // pred_region
      // Predicated region
      $region25: #{_dwt_impl.1} parent=23 // pred_check
        %p128 = pneg %p29
      $region26: #{_dwt_impl.1} parent=23 // pred_check_branch
        %130 = sbr.rel (%p128) target = $region28
      $region27: #{_dwt_impl.1} parent=23 // pred_region
        %s131 = smul.u32 4, %s9
        %p132 = scmp.lt.s32.totalorder %s131, 7
        %s133 = scalar_select %p132, %s131, 7
        %s134 = smul.addr %s133, 8
        %s135 = scalar_lea.vmem %s0, %s134
        %s136 = smul.u32 4, %s9
      $region28: #{_dwt_impl.1} parent=23 // pred_fallthru
        _
    $region24: #{_dwt_impl.1} parent=5 // pred_fallthru
      _
    %p137 = scmp.le.s32.totalorder 1, %s9
    %p138 = scmp.lt.s32.totalorder %s9, 3
    %p139 = pnand %p137, %p138
    %p140 = pneg %p139
    // Predicated region
    $region29: #{_dwt_impl.1} parent=5 // pred_check
      _
    $region30: #{_dwt_impl.1} parent=5 // pred_check_branch
      %142 = sbr.rel (%p139) target = $region32
    $region31: #{_dwt_impl.1} parent=5 // pred_region
      %s143 = ssub.s32 %s9, 1
      %s144 = smul.u32 4, %s14
      %p145 = scmp.lt.s32.totalorder %s144, 7
      %s146 = scalar_select %p145, %s144, 7
      %s147 = smul.addr %s146, 8
      %s148 = scalar_lea.vmem %s0, %s147
      %p149 = pneg %p35
      %p150 = pneg %p32
      %p151 = pneg %p56
      %p152 = pneg %p53
      %p153 = pneg %p77
      %p154 = pneg %p74
      %p155 = pneg %p103
      %p156 = pneg %p100
      %p157 = scmp.lt.s32.totalorder %s14, 1
      %s158 = scalar_select %p157, %s14, 1
      %s159 = smul.addr %s158, 16
      %s160 = smul.addr %s159, 8
      %s161 = scalar_lea.vmem %s3, %s160
      %s162 = smul.u32 4, %s14
      %p163 = scmp.lt.s32.totalorder %s162, 7
      %s164 = scalar_select %p163, %s162, 7
      %s165 = smul.addr %s164, 8
      %s166 = scalar_lea.vmem %s0, %s165
      %s167 = smul.u32 4, %s14
      %p168 = scmp.lt.s32.totalorder %s14, 1
      %s169 = scalar_select %p168, %s14, 1
      %s170 = smul.addr %s169, 16
      %s171 = smul.addr %s170, 8
      %s172 = scalar_lea.vmem %s3, %s171
      %v173 = vld [vmem:[%s1] sm:$0xff]
      %v174 = vld [vmem:[%s1 + $0x8] sm:$0xff]
      %v175 = vld [vmem:[%s2] sm:$0xff]
      %v176 = vld [vmem:[%s2 + $0x8] sm:$0xff]
      %v177 = vld [vmem:[%s166] sm:$0xff]
      %v178 = vld [vmem:[%s166 + $0x8] sm:$0xff]
      %v179 = vld [vmem:[%s166 + $0x10] sm:$0xff]
      %v180 = vld [vmem:[%s166 + $0x18] sm:$0xff]
      %185 = vrot.lane.b32.xlu0 %v177, 112
      %v186 = vpop.permute.xlu0 %185
      %187 = vrot.lane.b32.xlu0 %v178, 112
      %v188 = vpop.permute.xlu0 %187
      %189 = vrot.lane.b32.xlu0 %v179, 112
      %v190 = vpop.permute.xlu0 %189
      %191 = vrot.lane.b32.xlu0 %v180, 112
      %v192 = vpop.permute.xlu0 %191
      %v197 = vadd.f32 %v177, %v186
      %v198 = vadd.f32 %v178, %v188
      %v199 = vadd.f32 %v179, %v190
      %v200 = vadd.f32 %v180, %v192
      %201 = vrot.lane.b32.xlu0 %v177, 16
      %v202 = vpop.permute.xlu0 %201
      %203 = vrot.lane.b32.xlu0 %v178, 16
      %v204 = vpop.permute.xlu0 %203
      %205 = vrot.lane.b32.xlu0 %v179, 16
      %v206 = vpop.permute.xlu0 %205
      %207 = vrot.lane.b32.xlu0 %v180, 16
      %v208 = vpop.permute.xlu0 %207
      %v213 = vsub.f32 %v177, %v202
      %v214 = vsub.f32 %v178, %v204
      %v215 = vsub.f32 %v179, %v206
      %v216 = vsub.f32 %v180, %v208
      %vm217 = vcmask 130048
      %v219 = vsel %vm217, %v197, 0
      %v222 = vsel %vm217, %v198, 0
      %v225 = vsel %vm217, %v199, 0
      %v228 = vsel %vm217, %v200, 0
      %230 = vmatpush.msra.mxu0 0.0
      %231 = vmatpush.msra.mxu0 0.0
      %232 = vmatpush.msra.mxu0 0.0
      %233 = vmatpush.msra.mxu0 0.0
      %234 = vmatpush.msra.mxu0 0.0
      %235 = vmatpush.msra.mxu0 0.0
      %236 = vmatpush.msra.mxu0 0.0
      %237 = vmatpush.msra.mxu0 0.0
      %238 = vmatpush.msra.mxu0 0.0
      %239 = vmatpush.msra.mxu0 0.0
      %240 = vmatpush.msra.mxu0 0.0
      %241 = vmatpush.msra.mxu0 0.0
      %242 = vmatpush.msra.mxu0 0.0
      %243 = vmatpush.msra.mxu0 0.0
      %244 = vmatpush.msra.mxu0 %v174
      %245 = vmatpush.msra.mxu0 %v173
      %246 = vmatmul.f32.gmra.mxu0 %v219
      %v247 = vpop.f32.mrf.mxu0
      %v248 = vadd.f32 0.0, %v247
      %249 = vmatmul.f32.gmra.mxu0 %v222
      %v250 = vpop.f32.mrf.mxu0
      %v251 = vadd.f32 0.0, %v250
      %252 = vmatmul.f32.gmra.mxu0 %v225
      %v253 = vpop.f32.mrf.mxu0
      %v254 = vadd.f32 0.0, %v253
      %255 = vmatmul.f32.gmra.mxu0 %v228
      %v256 = vpop.f32.mrf.mxu0
      %v257 = vadd.f32 0.0, %v256
      %258 = vdwg.mxu0
      %259 = vmatpush.msra.mxu0 0.0
      %260 = vmatpush.msra.mxu0 0.0
      %261 = vmatpush.msra.mxu0 0.0
      %262 = vmatpush.msra.mxu0 0.0
      %263 = vmatpush.msra.mxu0 0.0
      %264 = vmatpush.msra.mxu0 0.0
      %265 = vmatpush.msra.mxu0 0.0
      %266 = vmatpush.msra.mxu0 0.0
      %267 = vmatpush.msra.mxu0 0.0
      %268 = vmatpush.msra.mxu0 0.0
      %269 = vmatpush.msra.mxu0 0.0
      %270 = vmatpush.msra.mxu0 0.0
      %271 = vmatpush.msra.mxu0 0.0
      %272 = vmatpush.msra.mxu0 0.0
      %273 = vmatpush.msra.mxu0 %v176
      %274 = vmatpush.msra.mxu0 %v175
      %275 = vmatmul.f32.gmra.mxu0 %v219
      %v276 = vpop.f32.mrf.mxu0
      %v277 = vadd.f32 0.0, %v276
      %278 = vmatmul.f32.gmra.mxu0 %v222
      %v279 = vpop.f32.mrf.mxu0
      %v280 = vadd.f32 0.0, %v279
      %281 = vmatmul.f32.gmra.mxu0 %v225
      %v282 = vpop.f32.mrf.mxu0
      %v283 = vadd.f32 0.0, %v282
      %284 = vmatmul.f32.gmra.mxu0 %v228
      %v285 = vpop.f32.mrf.mxu0
      %v286 = vadd.f32 0.0, %v285
      %287 = vdwg.mxu0
      %292 = vrot.lane.b32.xlu0 %v213, 112
      %v293 = vpop.permute.xlu0 %292
      %294 = vrot.lane.b32.xlu0 %v214, 112
      %v295 = vpop.permute.xlu0 %294
      %296 = vrot.lane.b32.xlu0 %v215, 112
      %v297 = vpop.permute.xlu0 %296
      %298 = vrot.lane.b32.xlu0 %v216, 112
      %v299 = vpop.permute.xlu0 %298
      %v300 = vsel %vm217, %v293, 0
      %v302 = vsel %vm217, %v295, 0
      %v304 = vsel %vm217, %v297, 0
      %v306 = vsel %vm217, %v299, 0
      %308 = vmatpush.msra.mxu0 0.0
      %309 = vmatpush.msra.mxu0 0.0
      %310 = vmatpush.msra.mxu0 0.0
      %311 = vmatpush.msra.mxu0 0.0
      %312 = vmatpush.msra.mxu0 0.0
      %313 = vmatpush.msra.mxu0 0.0
      %314 = vmatpush.msra.mxu0 0.0
      %315 = vmatpush.msra.mxu0 0.0
      %316 = vmatpush.msra.mxu0 0.0
      %317 = vmatpush.msra.mxu0 0.0
      %318 = vmatpush.msra.mxu0 0.0
      %319 = vmatpush.msra.mxu0 0.0
      %320 = vmatpush.msra.mxu0 0.0
      %321 = vmatpush.msra.mxu0 0.0
      %322 = vmatpush.msra.mxu0 %v174
      %323 = vmatpush.msra.mxu0 %v173
      %324 = vmatmul.f32.gmra.mxu0 %v300
      %v325 = vpop.f32.mrf.mxu0
      %v326 = vadd.f32 0.0, %v325
      %327 = vmatmul.f32.gmra.mxu0 %v302
      %v328 = vpop.f32.mrf.mxu0
      %v329 = vadd.f32 0.0, %v328
      %330 = vmatmul.f32.gmra.mxu0 %v304
      %v331 = vpop.f32.mrf.mxu0
      %v332 = vadd.f32 0.0, %v331
      %333 = vmatmul.f32.gmra.mxu0 %v306
      %v334 = vpop.f32.mrf.mxu0
      %v335 = vadd.f32 0.0, %v334
      %336 = vdwg.mxu0
      %337 = vmatpush.msra.mxu0 0.0
      %338 = vmatpush.msra.mxu0 0.0
      %339 = vmatpush.msra.mxu0 0.0
      %340 = vmatpush.msra.mxu0 0.0
      %341 = vmatpush.msra.mxu0 0.0
      %342 = vmatpush.msra.mxu0 0.0
      %343 = vmatpush.msra.mxu0 0.0
      %344 = vmatpush.msra.mxu0 0.0
      %345 = vmatpush.msra.mxu0 0.0
      %346 = vmatpush.msra.mxu0 0.0
      %347 = vmatpush.msra.mxu0 0.0
      %348 = vmatpush.msra.mxu0 0.0
      %349 = vmatpush.msra.mxu0 0.0
      %350 = vmatpush.msra.mxu0 0.0
      %351 = vmatpush.msra.mxu0 %v176
      %352 = vmatpush.msra.mxu0 %v175
      %353 = vmatmul.f32.gmra.mxu0 %v300
      %v354 = vpop.f32.mrf.mxu0
      %v355 = vadd.f32 0.0, %v354
      %356 = vmatmul.f32.gmra.mxu0 %v302
      %v357 = vpop.f32.mrf.mxu0
      %v358 = vadd.f32 0.0, %v357
      %359 = vmatmul.f32.gmra.mxu0 %v304
      %v360 = vpop.f32.mrf.mxu0
      %v361 = vadd.f32 0.0, %v360
      %362 = vmatmul.f32.gmra.mxu0 %v306
      %v363 = vpop.f32.mrf.mxu0
      %v364 = vadd.f32 0.0, %v363
      %365 = vdwg.mxu0
      %vm366 = vcmask 64512
      %367 = vst.msk [vmem:[%s172] sm:$0xff] %vm366, %v248
      %368 = vst.msk [vmem:[%s172 + $0x8] sm:$0xff] %vm366, %v251
      %369 = vst.msk [vmem:[%s172 + $0x10] sm:$0xff] %vm366, %v254
      %370 = vst.msk [vmem:[%s172 + $0x18] sm:$0xff] %vm366, %v257
      %s371 = scalar_lea.vmem %s172, 32
      %372 = vst.msk [vmem:[%s371] sm:$0xff] %vm366, %v277
      %373 = vst.msk [vmem:[%s371 + $0x8] sm:$0xff] %vm366, %v280
      %374 = vst.msk [vmem:[%s371 + $0x10] sm:$0xff] %vm366, %v283
      %375 = vst.msk [vmem:[%s371 + $0x18] sm:$0xff] %vm366, %v286
      %s376 = scalar_lea.vmem %s172, 64
      %377 = vst.msk [vmem:[%s376] sm:$0xff] %vm366, %v326
      %378 = vst.msk [vmem:[%s376 + $0x8] sm:$0xff] %vm366, %v329
      %379 = vst.msk [vmem:[%s376 + $0x10] sm:$0xff] %vm366, %v332
      %380 = vst.msk [vmem:[%s376 + $0x18] sm:$0xff] %vm366, %v335
      %s381 = scalar_lea.vmem %s172, 96
      %382 = vst.msk [vmem:[%s381] sm:$0xff] %vm366, %v355
      %383 = vst.msk [vmem:[%s381 + $0x8] sm:$0xff] %vm366, %v358
      %384 = vst.msk [vmem:[%s381 + $0x10] sm:$0xff] %vm366, %v361
      %385 = vst.msk [vmem:[%s381 + $0x18] sm:$0xff] %vm366, %v364
      %p386 = scmp.lt.s32.totalorder %s14, 1
      %s387 = scalar_select %p386, %s14, 1
      %s388 = smul.addr %s387, 16
      %s389 = smul.addr %s388, 8
      %s390 = scalar_lea.vmem %s3, %s389
      // Predicated region
      $region33: #{_dwt_impl.1} parent=31 // pred_check
        %p391 = pneg %p100
      $region34: #{_dwt_impl.1} parent=31 // pred_check_branch
        %393 = sbr.rel (%p391) target = $region36
      $region35: #{_dwt_impl.1} parent=31 // pred_region
        _
      $region36: #{_dwt_impl.1} parent=31 // pred_fallthru
        _
    $region32: #{_dwt_impl.1} parent=5 // pred_fallthru
      _
    %p394 = scmp.le.s32.totalorder 2, %s9
    // Predicated region
    $region37: #{_dwt_impl.1} parent=5 // pred_check
      %p395 = pneg %p394
    $region38: #{_dwt_impl.1} parent=5 // pred_check_branch
      %397 = sbr.rel (%p395) target = $region40
    $region39: #{_dwt_impl.1} parent=5 // pred_region
      %s398 = ssub.s32 %s9, 2
      // Predicated region
      $region41: #{_dwt_impl.1} parent=39 // pred_check
        %p399 = pneg %p106
      $region42: #{_dwt_impl.1} parent=39 // pred_check_branch
        %401 = sbr.rel (%p399) target = $region44
      $region43: #{_dwt_impl.1} parent=39 // pred_region
        %p402 = scmp.lt.s32.totalorder %s15, 1
        %s403 = scalar_select %p402, %s15, 1
        %s404 = smul.addr %s403, 16
        %s405 = smul.addr %s404, 8
        %s406 = scalar_lea.vmem %s3, %s405
      $region44: #{_dwt_impl.1} parent=39 // pred_fallthru
        _
    $region40: #{_dwt_impl.1} parent=5 // pred_fallthru
      _
  $region6: #{_dwt_impl.1} parent=0 // loop_footer
    %s13 = sadd.s32 1, %s9
  $region7: #{_dwt_impl.1} parent=0 // loop_footer_branch
    %8 = sbr.rel target = $region3
  $region8: #{_dwt_impl.1} parent=0 // loop_exit
    _

</llo_original>
